<compile_context>
chip_gen: v5e
topology: v5e:2x2
jax: 0.10.0
libtpu: 0.0.40
codegen_flags: <defaults>
</compile_context>

<pallas_src>
import functools

import numpy as np
import jax
import jax.numpy as jnp
from jax import lax
from jax.experimental import pallas as pl
from jax.experimental.pallas import tpu as pltpu


# =================== one-time parameter packing (host side, NOT in forward) ===========

def _pack_conv(w_oihw, bias, w_in):
    """Pack a 5x5/stride-2/pad-2 conv for the row-in-lanes formulation.

    Returns
      wk : (5, (w_in+4)*Cin, (w_in//2)*Cout) bf16 block-Toeplitz matrices; output row ho
           = sum_kh padded_input_row(2*ho+kh) @ wk[kh].
      bt : (1, (w_in//2)*Cout) f32 bias tiled over output columns.
    """
    w = np.asarray(w_oihw, np.float32)
    b = np.asarray(bias, np.float32)
    cout, cin, _, _ = w.shape
    wo = w_in // 2
    wp = w_in + 4
    wk = np.zeros((5, wp * cin, wo * cout), np.float32)
    for ow in range(wo):
        for kw in range(5):
            wi = 2 * ow + kw                          # padded input column
            wk[:, wi * cin:(wi + 1) * cin, ow * cout:(ow + 1) * cout] = (
                np.transpose(w[:, :, :, kw], (2, 1, 0)))   # (kh, cin, cout)
    bt = np.tile(b, wo).reshape(1, wo * cout)
    return jnp.asarray(wk, jnp.bfloat16), jnp.asarray(bt, jnp.float32)


def _pack_gdn(gamma, beta, wo):
    """Block-diagonal GDN matrices acting on the (wo*C)-wide lane layout."""
    g = np.asarray(gamma, np.float32)
    b = np.asarray(beta, np.float32)
    gbig = np.kron(np.eye(wo, dtype=np.float32), g.T)   # norm = y^2 @ gbig + beta_tiled
    bt = np.tile(b, wo).reshape(1, wo * g.shape[0])
    return jnp.asarray(gbig, jnp.float32), jnp.asarray(bt, jnp.float32)


def prepare_params(params, h, w):
    ws_in = (w, w // 2, w // 4, w // 8)
    packed = []
    for i in range(4):
        wk, bt = _pack_conv(params[f"w{i}"], params[f"b{i}"], ws_in[i])
        packed += [wk, bt]
        if i < 3:
            g, q = _pack_gdn(params[f"g{i}"], params[f"bt{i}"], ws_in[i] // 2)
            packed += [g, q]
    return tuple(packed)


# =============================== fused kernel ==========================================

def _conv_rows(e_ref, o_ref, w_ref, b_ref, ho):
    """5x5/stride-2 conv as 5 matmuls over even/odd padded input rows. Returns f32."""
    def lhs(ref, lo):
        return ref[lo:lo + ho, :].astype(jnp.bfloat16)
    y = (jnp.dot(lhs(e_ref, 0), w_ref[0], preferred_element_type=jnp.float32)
         + jnp.dot(lhs(o_ref, 0), w_ref[1], preferred_element_type=jnp.float32)
         + jnp.dot(lhs(e_ref, 1), w_ref[2], preferred_element_type=jnp.float32)
         + jnp.dot(lhs(o_ref, 1), w_ref[3], preferred_element_type=jnp.float32)
         + jnp.dot(lhs(e_ref, 2), w_ref[4], preferred_element_type=jnp.float32)
         + b_ref[...])
    return y                                  # (ho, Wo*Cout)


def _gdn(y, g_ref, beta_ref):
    norm = jnp.dot(y * y, g_ref[...], preferred_element_type=jnp.float32) + beta_ref[...]
    return y * lax.rsqrt(norm)


def _scatter_rows(y, e_ref, o_ref, cout):
    """Write layer output (f32, (Ho, Wo*Cout)) into the next layer's zero-padded,
    even/odd-row-split input buffers (output row ho -> padded row ho+2)."""
    e_ref[...] = jnp.zeros(e_ref.shape, e_ref.dtype)
    o_ref[...] = jnp.zeros(o_ref.shape, o_ref.dtype)
    ho, width = y.shape
    coff = 2 * cout                           # left pad of 2 columns
    for i in range(ho // 2):
        e_ref[1 + i:2 + i, coff:coff + width] = y[2 * i:2 * i + 1, :]
        o_ref[1 + i:2 + i, coff:coff + width] = y[2 * i + 1:2 * i + 2, :]


def _image_analysis_kernel(e0, o0,
                           w0, b0, g0, t0,
                           w1, b1, g1, t1,
                           w2, b2, g2, t2,
                           w3, b3,
                           out_ref,
                           e1, o1, e2, o2, e3, o3,
                           *, ho_list, couts):
    y = _gdn(_conv_rows(e0, o0, w0, b0, ho_list[0]), g0, t0)
    _scatter_rows(y, e1, o1, couts[0])
    y = _gdn(_conv_rows(e1, o1, w1, b1, ho_list[1]), g1, t1)
    _scatter_rows(y, e2, o2, couts[1])
    y = _gdn(_conv_rows(e2, o2, w2, b2, ho_list[2]), g2, t2)
    _scatter_rows(y, e3, o3, couts[2])
    y = _conv_rows(e3, o3, w3, b3, ho_list[3])            # final conv, no GDN
    out_ref[...] = y.astype(out_ref.dtype)


# =============================== wrapper / builder =====================================

def build_image_analysis(n, h, w, network_channels, compression_channels):
    assert h % 16 == 0 and w % 16 == 0
    nc, cc = network_channels, compression_channels
    cins = (3, nc, nc, nc)
    couts = (nc, nc, nc, cc)
    hs_in = (h, h // 2, h // 4, h // 8)
    ws_in = (w, w // 2, w // 4, w // 8)
    ho_list = tuple(hh // 2 for hh in hs_in)
    wo_list = tuple(ww // 2 for ww in ws_in)
    wpc = tuple((ws_in[i] + 4) * cins[i] for i in range(4))     # padded row width
    ywc = tuple(wo_list[i] * couts[i] for i in range(4))        # output row width

    kernel = functools.partial(_image_analysis_kernel, ho_list=ho_list, couts=couts)

    # scratch: even/odd padded-row input buffers for layers 1..3 (kept in VMEM, f32)
    scratch = []
    for i in (1, 2, 3):
        rows = (hs_in[i] + 4) // 2
        scratch += [pltpu.VMEM((rows, wpc[i]), jnp.float32),
                    pltpu.VMEM((rows, wpc[i]), jnp.float32)]

    def full(shape):
        return pl.BlockSpec(shape, lambda nn, s=shape: (0,) * len(s))

    e_rows0 = (hs_in[0] + 4) // 2
    batched = lambda nn: (nn, 0, 0)
    in_specs = [pl.BlockSpec((None, e_rows0, wpc[0]), batched),
                pl.BlockSpec((None, e_rows0, wpc[0]), batched)]
    for i in range(4):
        in_specs.append(full((5, wpc[i], ywc[i])))    # packed conv weights (bf16)
        in_specs.append(full((1, ywc[i])))            # tiled bias (f32)
        if i < 3:
            in_specs.append(full((ywc[i], ywc[i])))   # block-diag gamma^T (f32)
            in_specs.append(full((1, ywc[i])))        # tiled beta (f32)
    out_spec = pl.BlockSpec((None, ho_list[3], ywc[3]), batched)

    call = pl.pallas_call(
        kernel,
        out_shape=jax.ShapeDtypeStruct((n, ho_list[3], ywc[3]), jnp.float32),
        grid=(n,),
        in_specs=in_specs,
        out_specs=out_spec,
        scratch_shapes=scratch,
        compiler_params=pltpu.CompilerParams(dimension_semantics=("parallel",)),
    )

    def forward(x_nchw, packed):
        # the ONLY per-forward glue: layer-0 padded, row-flattened, even/odd-split input
        xh = jnp.transpose(x_nchw, (0, 2, 3, 1))                       # NHWC
        xp = jnp.pad(xh, ((0, 0), (2, 2), (2, 2), (0, 0)))
        xr = xp.reshape(n, hs_in[0] + 4, wpc[0]).astype(jnp.bfloat16)
        e0 = xr[:, 0::2, :]
        o0 = xr[:, 1::2, :]
        out = call(e0, o0, *packed)                                     # (N, Ho3, Wo3*cc)
        out = out.reshape(n, ho_list[3], wo_list[3], cc)
        return jnp.transpose(out, (0, 3, 1, 2))                        # NCHW

    return forward


# =============================== params & reference ====================================

def init_params(key, network_channels, compression_channels):
    cs = [(3, network_channels), (network_channels, network_channels),
          (network_channels, network_channels),
          (network_channels, compression_channels)]
    params = {}
    keys = jax.random.split(key, 8)
    for li, (cin, cout) in enumerate(cs):
        params[f"w{li}"] = 0.1 * jax.random.normal(keys[li], (cout, cin, 5, 5), jnp.float32)
        params[f"b{li}"] = jnp.zeros((cout,), jnp.float32)
    # synthetic GDN params: gamma ~ 0.1*I + small positive, beta = 1
    for li in range(3):
        c = network_channels
        g = 0.1 * jnp.eye(c, dtype=jnp.float32) + 0.01 * jnp.abs(
            jax.random.normal(keys[4 + li], (c, c), jnp.float32))
        params[f"g{li}"] = g
        params[f"bt{li}"] = jnp.ones((c,), jnp.float32)
    return params


def reference_forward(x_nchw, params):
    def conv(x, w, b):
        y = lax.conv_general_dilated(x, w, window_strides=(2, 2),
                                     padding=((2, 2), (2, 2)),
                                     dimension_numbers=("NCHW", "OIHW", "NCHW"))
        return y + b.reshape(1, -1, 1, 1)

    def gdn(x, g, bt):
        norm = jnp.einsum("ij,njhw->nihw", g, x * x) + bt.reshape(1, -1, 1, 1)
        return x * lax.rsqrt(norm)

    x = gdn(conv(x_nchw, params["w0"], params["b0"]), params["g0"], params["bt0"])
    x = gdn(conv(x, params["w1"], params["b1"]), params["g1"], params["bt1"])
    x = gdn(conv(x, params["w2"], params["b2"]), params["g2"], params["bt2"])
    return conv(x, params["w3"], params["b3"])


# ====================================== demo ===========================================

if __name__ == "__main__":
    network_channels = 8
    compression_channels = 4
    N, H, W = 2, 16, 16

    key = jax.random.PRNGKey(0)
    k_params, k_x = jax.random.split(key)
    params = init_params(k_params, network_channels, compression_channels)
    packed = prepare_params(params, H, W)          # one-time packing, outside the hot path
    x = jax.random.normal(k_x, (N, 3, H, W), jnp.float32)

    fwd = jax.jit(build_image_analysis(N, H, W, network_channels, compression_channels))
    out = jax.block_until_ready(fwd(x, packed))

    assert out.shape == (N, compression_channels, H // 16, W // 16), out.shape
    assert bool(jnp.all(jnp.isfinite(out)))

    ref = jax.block_until_ready(jax.jit(reference_forward)(x, params))
    rel = float(jnp.max(jnp.abs(out - ref)) / (jnp.max(jnp.abs(ref)) + 1e-6))
    assert rel < 0.1, f"mismatch vs f32 reference: rel={rel}"

    print("KERNEL_OK")
</pallas_src>

<mosaic_0001>
module attributes {stable_mosaic.version = 11 : i64} {
  func.func @_image_analysis_kernel(%arg0: i32, %arg1: memref<1x10x60xbf16, #tpu.memory_space<vmem>>, %arg2: memref<1x10x60xbf16, #tpu.memory_space<vmem>>, %arg3: memref<5x60x64xbf16, #tpu.memory_space<vmem>>, %arg4: memref<1x64xf32, #tpu.memory_space<vmem>>, %arg5: memref<64x64xf32, #tpu.memory_space<vmem>>, %arg6: memref<1x64xf32, #tpu.memory_space<vmem>>, %arg7: memref<5x96x32xbf16, #tpu.memory_space<vmem>>, %arg8: memref<1x32xf32, #tpu.memory_space<vmem>>, %arg9: memref<32x32xf32, #tpu.memory_space<vmem>>, %arg10: memref<1x32xf32, #tpu.memory_space<vmem>>, %arg11: memref<5x64x16xbf16, #tpu.memory_space<vmem>>, %arg12: memref<1x16xf32, #tpu.memory_space<vmem>>, %arg13: memref<16x16xf32, #tpu.memory_space<vmem>>, %arg14: memref<1x16xf32, #tpu.memory_space<vmem>>, %arg15: memref<5x48x4xbf16, #tpu.memory_space<vmem>>, %arg16: memref<1x4xf32, #tpu.memory_space<vmem>>, %arg17: memref<1x1x4xf32, #tpu.memory_space<vmem>>, %arg18: memref<6x96xf32, #tpu.memory_space<vmem>>, %arg19: memref<6x96xf32, #tpu.memory_space<vmem>>, %arg20: memref<4x64xf32, #tpu.memory_space<vmem>>, %arg21: memref<4x64xf32, #tpu.memory_space<vmem>>, %arg22: memref<3x48xf32, #tpu.memory_space<vmem>>, %arg23: memref<3x48xf32, #tpu.memory_space<vmem>>) attributes {dimension_semantics = [#tpu.dimension_semantics<parallel>], iteration_bounds = array<i64: 2>, scalar_prefetch = 0 : i64, scratch_operands = 6 : i64, tpu.core_type = #tpu.core_type<tc>, window_params = [{transform_indices = @transform_0, window_bounds = array<i64: 1, 10, 60>}, {transform_indices = @transform_1, window_bounds = array<i64: 1, 10, 60>}, {pipeline_mode = #tpu.pipeline_mode<synchronous>, transform_indices = @transform_2, window_bounds = array<i64: 5, 60, 64>}, {pipeline_mode = #tpu.pipeline_mode<synchronous>, transform_indices = @transform_3, window_bounds = array<i64: 1, 64>}, {pipeline_mode = #tpu.pipeline_mode<synchronous>, transform_indices = @transform_4, window_bounds = array<i64: 64, 64>}, {pipeline_mode = #tpu.pipeline_mode<synchronous>, transform_indices = @transform_5, window_bounds = array<i64: 1, 64>}, {pipeline_mode = #tpu.pipeline_mode<synchronous>, transform_indices = @transform_6, window_bounds = array<i64: 5, 96, 32>}, {pipeline_mode = #tpu.pipeline_mode<synchronous>, transform_indices = @transform_7, window_bounds = array<i64: 1, 32>}, {pipeline_mode = #tpu.pipeline_mode<synchronous>, transform_indices = @transform_8, window_bounds = array<i64: 32, 32>}, {pipeline_mode = #tpu.pipeline_mode<synchronous>, transform_indices = @transform_9, window_bounds = array<i64: 1, 32>}, {pipeline_mode = #tpu.pipeline_mode<synchronous>, transform_indices = @transform_10, window_bounds = array<i64: 5, 64, 16>}, {pipeline_mode = #tpu.pipeline_mode<synchronous>, transform_indices = @transform_11, window_bounds = array<i64: 1, 16>}, {pipeline_mode = #tpu.pipeline_mode<synchronous>, transform_indices = @transform_12, window_bounds = array<i64: 16, 16>}, {pipeline_mode = #tpu.pipeline_mode<synchronous>, transform_indices = @transform_13, window_bounds = array<i64: 1, 16>}, {pipeline_mode = #tpu.pipeline_mode<synchronous>, transform_indices = @transform_14, window_bounds = array<i64: 5, 48, 4>}, {pipeline_mode = #tpu.pipeline_mode<synchronous>, transform_indices = @transform_15, window_bounds = array<i64: 1, 4>}, {transform_indices = @transform_16, window_bounds = array<i64: 1, 1, 4>}]} {
    %c0 = arith.constant 0 : index
    %c0_0 = arith.constant 0 : index
    %c0_1 = arith.constant 0 : index
    %0 = vector.load %arg1[%c0, %c0_0, %c0_1] : memref<1x10x60xbf16, #tpu.memory_space<vmem>>, vector<1x8x60xbf16>
    %1 = vector.shape_cast %0 : vector<1x8x60xbf16> to vector<8x60xbf16>
    %c0_2 = arith.constant 0 : index
    %c0_3 = arith.constant 0 : index
    %c0_4 = arith.constant 0 : index
    %2 = vector.load %arg3[%c0_2, %c0_3, %c0_4] : memref<5x60x64xbf16, #tpu.memory_space<vmem>>, vector<1x60x64xbf16>
    %3 = vector.shape_cast %2 : vector<1x60x64xbf16> to vector<60x64xbf16>
    %cst = arith.constant dense<0.000000e+00> : vector<8x64xf32>
    %4 = tpu.matmul %1, %3, %cst {dimension_numbers = #tpu.dot_dimension_numbers<[1], [0], [0], [1], [0, 0, 1, 1], [], []>} : vector<8x60xbf16>, vector<60x64xbf16>, vector<8x64xf32> -> vector<8x64xf32>
    %c0_5 = arith.constant 0 : index
    %c0_6 = arith.constant 0 : index
    %c0_7 = arith.constant 0 : index
    %5 = vector.load %arg2[%c0_5, %c0_6, %c0_7] : memref<1x10x60xbf16, #tpu.memory_space<vmem>>, vector<1x8x60xbf16>
    %6 = vector.shape_cast %5 : vector<1x8x60xbf16> to vector<8x60xbf16>
    %c1 = arith.constant 1 : index
    %c0_8 = arith.constant 0 : index
    %c0_9 = arith.constant 0 : index
    %7 = vector.load %arg3[%c1, %c0_8, %c0_9] : memref<5x60x64xbf16, #tpu.memory_space<vmem>>, vector<1x60x64xbf16>
    %8 = vector.shape_cast %7 : vector<1x60x64xbf16> to vector<60x64xbf16>
    %cst_10 = arith.constant dense<0.000000e+00> : vector<8x64xf32>
    %9 = tpu.matmul %6, %8, %cst_10 {dimension_numbers = #tpu.dot_dimension_numbers<[1], [0], [0], [1], [0, 0, 1, 1], [], []>} : vector<8x60xbf16>, vector<60x64xbf16>, vector<8x64xf32> -> vector<8x64xf32>
    %10 = arith.addf %4, %9 : vector<8x64xf32>
    %c0_11 = arith.constant 0 : index
    %c1_12 = arith.constant 1 : index
    %c0_13 = arith.constant 0 : index
    %11 = vector.load %arg1[%c0_11, %c1_12, %c0_13] : memref<1x10x60xbf16, #tpu.memory_space<vmem>>, vector<1x8x60xbf16>
    %12 = vector.shape_cast %11 : vector<1x8x60xbf16> to vector<8x60xbf16>
    %c2 = arith.constant 2 : index
    %c0_14 = arith.constant 0 : index
    %c0_15 = arith.constant 0 : index
    %13 = vector.load %arg3[%c2, %c0_14, %c0_15] : memref<5x60x64xbf16, #tpu.memory_space<vmem>>, vector<1x60x64xbf16>
    %14 = vector.shape_cast %13 : vector<1x60x64xbf16> to vector<60x64xbf16>
    %cst_16 = arith.constant dense<0.000000e+00> : vector<8x64xf32>
    %15 = tpu.matmul %12, %14, %cst_16 {dimension_numbers = #tpu.dot_dimension_numbers<[1], [0], [0], [1], [0, 0, 1, 1], [], []>} : vector<8x60xbf16>, vector<60x64xbf16>, vector<8x64xf32> -> vector<8x64xf32>
    %16 = arith.addf %10, %15 : vector<8x64xf32>
    %c0_17 = arith.constant 0 : index
    %c1_18 = arith.constant 1 : index
    %c0_19 = arith.constant 0 : index
    %17 = vector.load %arg2[%c0_17, %c1_18, %c0_19] : memref<1x10x60xbf16, #tpu.memory_space<vmem>>, vector<1x8x60xbf16>
    %18 = vector.shape_cast %17 : vector<1x8x60xbf16> to vector<8x60xbf16>
    %c3 = arith.constant 3 : index
    %c0_20 = arith.constant 0 : index
    %c0_21 = arith.constant 0 : index
    %19 = vector.load %arg3[%c3, %c0_20, %c0_21] : memref<5x60x64xbf16, #tpu.memory_space<vmem>>, vector<1x60x64xbf16>
    %20 = vector.shape_cast %19 : vector<1x60x64xbf16> to vector<60x64xbf16>
    %cst_22 = arith.constant dense<0.000000e+00> : vector<8x64xf32>
    %21 = tpu.matmul %18, %20, %cst_22 {dimension_numbers = #tpu.dot_dimension_numbers<[1], [0], [0], [1], [0, 0, 1, 1], [], []>} : vector<8x60xbf16>, vector<60x64xbf16>, vector<8x64xf32> -> vector<8x64xf32>
    %22 = arith.addf %16, %21 : vector<8x64xf32>
    %c0_23 = arith.constant 0 : index
    %c2_24 = arith.constant 2 : index
    %c0_25 = arith.constant 0 : index
    %23 = vector.load %arg1[%c0_23, %c2_24, %c0_25] : memref<1x10x60xbf16, #tpu.memory_space<vmem>>, vector<1x8x60xbf16>
    %24 = vector.shape_cast %23 : vector<1x8x60xbf16> to vector<8x60xbf16>
    %c4 = arith.constant 4 : index
    %c0_26 = arith.constant 0 : index
    %c0_27 = arith.constant 0 : index
    %25 = vector.load %arg3[%c4, %c0_26, %c0_27] : memref<5x60x64xbf16, #tpu.memory_space<vmem>>, vector<1x60x64xbf16>
    %26 = vector.shape_cast %25 : vector<1x60x64xbf16> to vector<60x64xbf16>
    %cst_28 = arith.constant dense<0.000000e+00> : vector<8x64xf32>
    %27 = tpu.matmul %24, %26, %cst_28 {dimension_numbers = #tpu.dot_dimension_numbers<[1], [0], [0], [1], [0, 0, 1, 1], [], []>} : vector<8x60xbf16>, vector<60x64xbf16>, vector<8x64xf32> -> vector<8x64xf32>
    %28 = arith.addf %22, %27 : vector<8x64xf32>
    %c0_29 = arith.constant 0 : index
    %c0_30 = arith.constant 0 : index
    %29 = vector.load %arg4[%c0_29, %c0_30] : memref<1x64xf32, #tpu.memory_space<vmem>>, vector<1x64xf32>
    %30 = vector.broadcast %29 : vector<1x64xf32> to vector<8x64xf32>
    %31 = arith.addf %28, %30 : vector<8x64xf32>
    %32 = arith.mulf %31, %31 : vector<8x64xf32>
    %c0_31 = arith.constant 0 : index
    %c0_32 = arith.constant 0 : index
    %33 = vector.load %arg5[%c0_31, %c0_32] : memref<64x64xf32, #tpu.memory_space<vmem>>, vector<64x64xf32>
    %cst_33 = arith.constant dense<0.000000e+00> : vector<8x64xf32>
    %34 = tpu.matmul %32, %33, %cst_33 {dimension_numbers = #tpu.dot_dimension_numbers<[1], [0], [0], [1], [0, 0, 1, 1], [], []>} : vector<8x64xf32>, vector<64x64xf32>, vector<8x64xf32> -> vector<8x64xf32>
    %c0_34 = arith.constant 0 : index
    %c0_35 = arith.constant 0 : index
    %35 = vector.load %arg6[%c0_34, %c0_35] : memref<1x64xf32, #tpu.memory_space<vmem>>, vector<1x64xf32>
    %36 = vector.broadcast %35 : vector<1x64xf32> to vector<8x64xf32>
    %37 = arith.addf %34, %36 : vector<8x64xf32>
    %38 = math.rsqrt %37 : vector<8x64xf32>
    %39 = arith.mulf %31, %38 : vector<8x64xf32>
    %cst_36 = arith.constant 0.000000e+00 : f32
    %40 = vector.broadcast %cst_36 : f32 to vector<6x96xf32>
    %c0_37 = arith.constant 0 : index
    %c0_38 = arith.constant 0 : index
    %41 = vector.load %arg18[%c0_37, %c0_38] : memref<6x96xf32, #tpu.memory_space<vmem>>, vector<6x96xf32>
    tpu.vector_store %arg18[%c0_37, %c0_38], %40 {strides = array<i32>} : memref<6x96xf32, #tpu.memory_space<vmem>>, vector<6x96xf32>,
    %cst_39 = arith.constant 0.000000e+00 : f32
    %42 = vector.broadcast %cst_39 : f32 to vector<6x96xf32>
    %c0_40 = arith.constant 0 : index
    %c0_41 = arith.constant 0 : index
    %43 = vector.load %arg19[%c0_40, %c0_41] : memref<6x96xf32, #tpu.memory_space<vmem>>, vector<6x96xf32>
    tpu.vector_store %arg19[%c0_40, %c0_41], %42 {strides = array<i32>} : memref<6x96xf32, #tpu.memory_space<vmem>>, vector<6x96xf32>,
    %44 = vector.extract_strided_slice %39 {offsets = [0, 0], sizes = [1, 64], strides = [1, 1]} : vector<8x64xf32> to vector<1x64xf32>
    %c1_42 = arith.constant 1 : index
    %c16 = arith.constant 16 : index
    %45 = vector.load %arg18[%c1_42, %c16] : memref<6x96xf32, #tpu.memory_space<vmem>>, vector<1x64xf32>
    tpu.vector_store %arg18[%c1_42, %c16], %44 {strides = array<i32>} : memref<6x96xf32, #tpu.memory_space<vmem>>, vector<1x64xf32>,
    %46 = vector.extract_strided_slice %39 {offsets = [1, 0], sizes = [1, 64], strides = [1, 1]} : vector<8x64xf32> to vector<1x64xf32>
    %c1_43 = arith.constant 1 : index
    %c16_44 = arith.constant 16 : index
    %47 = vector.load %arg19[%c1_43, %c16_44] : memref<6x96xf32, #tpu.memory_space<vmem>>, vector<1x64xf32>
    tpu.vector_store %arg19[%c1_43, %c16_44], %46 {strides = array<i32>} : memref<6x96xf32, #tpu.memory_space<vmem>>, vector<1x64xf32>,
    %48 = vector.extract_strided_slice %39 {offsets = [2, 0], sizes = [1, 64], strides = [1, 1]} : vector<8x64xf32> to vector<1x64xf32>
    %c2_45 = arith.constant 2 : index
    %c16_46 = arith.constant 16 : index
    %49 = vector.load %arg18[%c2_45, %c16_46] : memref<6x96xf32, #tpu.memory_space<vmem>>, vector<1x64xf32>
    tpu.vector_store %arg18[%c2_45, %c16_46], %48 {strides = array<i32>} : memref<6x96xf32, #tpu.memory_space<vmem>>, vector<1x64xf32>,
    %50 = vector.extract_strided_slice %39 {offsets = [3, 0], sizes = [1, 64], strides = [1, 1]} : vector<8x64xf32> to vector<1x64xf32>
    %c2_47 = arith.constant 2 : index
    %c16_48 = arith.constant 16 : index
    %51 = vector.load %arg19[%c2_47, %c16_48] : memref<6x96xf32, #tpu.memory_space<vmem>>, vector<1x64xf32>
    tpu.vector_store %arg19[%c2_47, %c16_48], %50 {strides = array<i32>} : memref<6x96xf32, #tpu.memory_space<vmem>>, vector<1x64xf32>,
    %52 = vector.extract_strided_slice %39 {offsets = [4, 0], sizes = [1, 64], strides = [1, 1]} : vector<8x64xf32> to vector<1x64xf32>
    %c3_49 = arith.constant 3 : index
    %c16_50 = arith.constant 16 : index
    %53 = vector.load %arg18[%c3_49, %c16_50] : memref<6x96xf32, #tpu.memory_space<vmem>>, vector<1x64xf32>
    tpu.vector_store %arg18[%c3_49, %c16_50], %52 {strides = array<i32>} : memref<6x96xf32, #tpu.memory_space<vmem>>, vector<1x64xf32>,
    %54 = vector.extract_strided_slice %39 {offsets = [5, 0], sizes = [1, 64], strides = [1, 1]} : vector<8x64xf32> to vector<1x64xf32>
    %c3_51 = arith.constant 3 : index
    %c16_52 = arith.constant 16 : index
    %55 = vector.load %arg19[%c3_51, %c16_52] : memref<6x96xf32, #tpu.memory_space<vmem>>, vector<1x64xf32>
    tpu.vector_store %arg19[%c3_51, %c16_52], %54 {strides = array<i32>} : memref<6x96xf32, #tpu.memory_space<vmem>>, vector<1x64xf32>,
    %56 = vector.extract_strided_slice %39 {offsets = [6, 0], sizes = [1, 64], strides = [1, 1]} : vector<8x64xf32> to vector<1x64xf32>
    %c4_53 = arith.constant 4 : index
    %c16_54 = arith.constant 16 : index
    %57 = vector.load %arg18[%c4_53, %c16_54] : memref<6x96xf32, #tpu.memory_space<vmem>>, vector<1x64xf32>
    tpu.vector_store %arg18[%c4_53, %c16_54], %56 {strides = array<i32>} : memref<6x96xf32, #tpu.memory_space<vmem>>, vector<1x64xf32>,
    %58 = vector.extract_strided_slice %39 {offsets = [7, 0], sizes = [1, 64], strides = [1, 1]} : vector<8x64xf32> to vector<1x64xf32>
    %c4_55 = arith.constant 4 : index
    %c16_56 = arith.constant 16 : index
    %59 = vector.load %arg19[%c4_55, %c16_56] : memref<6x96xf32, #tpu.memory_space<vmem>>, vector<1x64xf32>
    tpu.vector_store %arg19[%c4_55, %c16_56], %58 {strides = array<i32>} : memref<6x96xf32, #tpu.memory_space<vmem>>, vector<1x64xf32>,
    %c0_57 = arith.constant 0 : index
    %c0_58 = arith.constant 0 : index
    %60 = vector.load %arg18[%c0_57, %c0_58] : memref<6x96xf32, #tpu.memory_space<vmem>>, vector<4x96xf32>
    %61 = arith.truncf %60 : vector<4x96xf32> to vector<4x96xbf16>
    %c0_59 = arith.constant 0 : index
    %c0_60 = arith.constant 0 : index
    %c0_61 = arith.constant 0 : index
    %62 = vector.load %arg7[%c0_59, %c0_60, %c0_61] : memref<5x96x32xbf16, #tpu.memory_space<vmem>>, vector<1x96x32xbf16>
    %63 = vector.shape_cast %62 : vector<1x96x32xbf16> to vector<96x32xbf16>
    %cst_62 = arith.constant dense<0.000000e+00> : vector<4x32xf32>
    %64 = tpu.matmul %61, %63, %cst_62 {dimension_numbers = #tpu.dot_dimension_numbers<[1], [0], [0], [1], [0, 0, 1, 1], [], []>} : vector<4x96xbf16>, vector<96x32xbf16>, vector<4x32xf32> -> vector<4x32xf32>
    %c0_63 = arith.constant 0 : index
    %c0_64 = arith.constant 0 : index
    %65 = vector.load %arg19[%c0_63, %c0_64] : memref<6x96xf32, #tpu.memory_space<vmem>>, vector<4x96xf32>
    %66 = arith.truncf %65 : vector<4x96xf32> to vector<4x96xbf16>
    %c1_65 = arith.constant 1 : index
    %c0_66 = arith.constant 0 : index
    %c0_67 = arith.constant 0 : index
    %67 = vector.load %arg7[%c1_65, %c0_66, %c0_67] : memref<5x96x32xbf16, #tpu.memory_space<vmem>>, vector<1x96x32xbf16>
    %68 = vector.shape_cast %67 : vector<1x96x32xbf16> to vector<96x32xbf16>
    %cst_68 = arith.constant dense<0.000000e+00> : vector<4x32xf32>
    %69 = tpu.matmul %66, %68, %cst_68 {dimension_numbers = #tpu.dot_dimension_numbers<[1], [0], [0], [1], [0, 0, 1, 1], [], []>} : vector<4x96xbf16>, vector<96x32xbf16>, vector<4x32xf32> -> vector<4x32xf32>
    %70 = arith.addf %64, %69 : vector<4x32xf32>
    %c1_69 = arith.constant 1 : index
    %c0_70 = arith.constant 0 : index
    %71 = vector.load %arg18[%c1_69, %c0_70] : memref<6x96xf32, #tpu.memory_space<vmem>>, vector<4x96xf32>
    %72 = arith.truncf %71 : vector<4x96xf32> to vector<4x96xbf16>
    %c2_71 = arith.constant 2 : index
    %c0_72 = arith.constant 0 : index
    %c0_73 = arith.constant 0 : index
    %73 = vector.load %arg7[%c2_71, %c0_72, %c0_73] : memref<5x96x32xbf16, #tpu.memory_space<vmem>>, vector<1x96x32xbf16>
    %74 = vector.shape_cast %73 : vector<1x96x32xbf16> to vector<96x32xbf16>
    %cst_74 = arith.constant dense<0.000000e+00> : vector<4x32xf32>
    %75 = tpu.matmul %72, %74, %cst_74 {dimension_numbers = #tpu.dot_dimension_numbers<[1], [0], [0], [1], [0, 0, 1, 1], [], []>} : vector<4x96xbf16>, vector<96x32xbf16>, vector<4x32xf32> -> vector<4x32xf32>
    %76 = arith.addf %70, %75 : vector<4x32xf32>
    %c1_75 = arith.constant 1 : index
    %c0_76 = arith.constant 0 : index
    %77 = vector.load %arg19[%c1_75, %c0_76] : memref<6x96xf32, #tpu.memory_space<vmem>>, vector<4x96xf32>
    %78 = arith.truncf %77 : vector<4x96xf32> to vector<4x96xbf16>
    %c3_77 = arith.constant 3 : index
    %c0_78 = arith.constant 0 : index
    %c0_79 = arith.constant 0 : index
    %79 = vector.load %arg7[%c3_77, %c0_78, %c0_79] : memref<5x96x32xbf16, #tpu.memory_space<vmem>>, vector<1x96x32xbf16>
    %80 = vector.shape_cast %79 : vector<1x96x32xbf16> to vector<96x32xbf16>
    %cst_80 = arith.constant dense<0.000000e+00> : vector<4x32xf32>
    %81 = tpu.matmul %78, %80, %cst_80 {dimension_numbers = #tpu.dot_dimension_numbers<[1], [0], [0], [1], [0, 0, 1, 1], [], []>} : vector<4x96xbf16>, vector<96x32xbf16>, vector<4x32xf32> -> vector<4x32xf32>
    %82 = arith.addf %76, %81 : vector<4x32xf32>
    %c2_81 = arith.constant 2 : index
    %c0_82 = arith.constant 0 : index
    %83 = vector.load %arg18[%c2_81, %c0_82] : memref<6x96xf32, #tpu.memory_space<vmem>>, vector<4x96xf32>
    %84 = arith.truncf %83 : vector<4x96xf32> to vector<4x96xbf16>
    %c4_83 = arith.constant 4 : index
    %c0_84 = arith.constant 0 : index
    %c0_85 = arith.constant 0 : index
    %85 = vector.load %arg7[%c4_83, %c0_84, %c0_85] : memref<5x96x32xbf16, #tpu.memory_space<vmem>>, vector<1x96x32xbf16>
    %86 = vector.shape_cast %85 : vector<1x96x32xbf16> to vector<96x32xbf16>
    %cst_86 = arith.constant dense<0.000000e+00> : vector<4x32xf32>
    %87 = tpu.matmul %84, %86, %cst_86 {dimension_numbers = #tpu.dot_dimension_numbers<[1], [0], [0], [1], [0, 0, 1, 1], [], []>} : vector<4x96xbf16>, vector<96x32xbf16>, vector<4x32xf32> -> vector<4x32xf32>
    %88 = arith.addf %82, %87 : vector<4x32xf32>
    %c0_87 = arith.constant 0 : index
    %c0_88 = arith.constant 0 : index
    %89 = vector.load %arg8[%c0_87, %c0_88] : memref<1x32xf32, #tpu.memory_space<vmem>>, vector<1x32xf32>
    %90 = vector.broadcast %89 : vector<1x32xf32> to vector<4x32xf32>
    %91 = arith.addf %88, %90 : vector<4x32xf32>
    %92 = arith.mulf %91, %91 : vector<4x32xf32>
    %c0_89 = arith.constant 0 : index
    %c0_90 = arith.constant 0 : index
    %93 = vector.load %arg9[%c0_89, %c0_90] : memref<32x32xf32, #tpu.memory_space<vmem>>, vector<32x32xf32>
    %cst_91 = arith.constant dense<0.000000e+00> : vector<4x32xf32>
    %94 = tpu.matmul %92, %93, %cst_91 {dimension_numbers = #tpu.dot_dimension_numbers<[1], [0], [0], [1], [0, 0, 1, 1], [], []>} : vector<4x32xf32>, vector<32x32xf32>, vector<4x32xf32> -> vector<4x32xf32>
    %c0_92 = arith.constant 0 : index
    %c0_93 = arith.constant 0 : index
    %95 = vector.load %arg10[%c0_92, %c0_93] : memref<1x32xf32, #tpu.memory_space<vmem>>, vector<1x32xf32>
    %96 = vector.broadcast %95 : vector<1x32xf32> to vector<4x32xf32>
    %97 = arith.addf %94, %96 : vector<4x32xf32>
    %98 = math.rsqrt %97 : vector<4x32xf32>
    %99 = arith.mulf %91, %98 : vector<4x32xf32>
    %cst_94 = arith.constant 0.000000e+00 : f32
    %100 = vector.broadcast %cst_94 : f32 to vector<4x64xf32>
    %c0_95 = arith.constant 0 : index
    %c0_96 = arith.constant 0 : index
    %101 = vector.load %arg20[%c0_95, %c0_96] : memref<4x64xf32, #tpu.memory_space<vmem>>, vector<4x64xf32>
    tpu.vector_store %arg20[%c0_95, %c0_96], %100 {strides = array<i32>} : memref<4x64xf32, #tpu.memory_space<vmem>>, vector<4x64xf32>,
    %cst_97 = arith.constant 0.000000e+00 : f32
    %102 = vector.broadcast %cst_97 : f32 to vector<4x64xf32>
    %c0_98 = arith.constant 0 : index
    %c0_99 = arith.constant 0 : index
    %103 = vector.load %arg21[%c0_98, %c0_99] : memref<4x64xf32, #tpu.memory_space<vmem>>, vector<4x64xf32>
    tpu.vector_store %arg21[%c0_98, %c0_99], %102 {strides = array<i32>} : memref<4x64xf32, #tpu.memory_space<vmem>>, vector<4x64xf32>,
    %104 = vector.extract_strided_slice %99 {offsets = [0, 0], sizes = [1, 32], strides = [1, 1]} : vector<4x32xf32> to vector<1x32xf32>
    %c1_100 = arith.constant 1 : index
    %c16_101 = arith.constant 16 : index
    %105 = vector.load %arg20[%c1_100, %c16_101] : memref<4x64xf32, #tpu.memory_space<vmem>>, vector<1x32xf32>
    tpu.vector_store %arg20[%c1_100, %c16_101], %104 {strides = array<i32>} : memref<4x64xf32, #tpu.memory_space<vmem>>, vector<1x32xf32>,
    %106 = vector.extract_strided_slice %99 {offsets = [1, 0], sizes = [1, 32], strides = [1, 1]} : vector<4x32xf32> to vector<1x32xf32>
    %c1_102 = arith.constant 1 : index
    %c16_103 = arith.constant 16 : index
    %107 = vector.load %arg21[%c1_102, %c16_103] : memref<4x64xf32, #tpu.memory_space<vmem>>, vector<1x32xf32>
    tpu.vector_store %arg21[%c1_102, %c16_103], %106 {strides = array<i32>} : memref<4x64xf32, #tpu.memory_space<vmem>>, vector<1x32xf32>,
    %108 = vector.extract_strided_slice %99 {offsets = [2, 0], sizes = [1, 32], strides = [1, 1]} : vector<4x32xf32> to vector<1x32xf32>
    %c2_104 = arith.constant 2 : index
    %c16_105 = arith.constant 16 : index
    %109 = vector.load %arg20[%c2_104, %c16_105] : memref<4x64xf32, #tpu.memory_space<vmem>>, vector<1x32xf32>
    tpu.vector_store %arg20[%c2_104, %c16_105], %108 {strides = array<i32>} : memref<4x64xf32, #tpu.memory_space<vmem>>, vector<1x32xf32>,
    %110 = vector.extract_strided_slice %99 {offsets = [3, 0], sizes = [1, 32], strides = [1, 1]} : vector<4x32xf32> to vector<1x32xf32>
    %c2_106 = arith.constant 2 : index
    %c16_107 = arith.constant 16 : index
    %111 = vector.load %arg21[%c2_106, %c16_107] : memref<4x64xf32, #tpu.memory_space<vmem>>, vector<1x32xf32>
    tpu.vector_store %arg21[%c2_106, %c16_107], %110 {strides = array<i32>} : memref<4x64xf32, #tpu.memory_space<vmem>>, vector<1x32xf32>,
    %c0_108 = arith.constant 0 : index
    %c0_109 = arith.constant 0 : index
    %112 = vector.load %arg20[%c0_108, %c0_109] : memref<4x64xf32, #tpu.memory_space<vmem>>, vector<2x64xf32>
    %113 = arith.truncf %112 : vector<2x64xf32> to vector<2x64xbf16>
    %c0_110 = arith.constant 0 : index
    %c0_111 = arith.constant 0 : index
    %c0_112 = arith.constant 0 : index
    %114 = vector.load %arg11[%c0_110, %c0_111, %c0_112] : memref<5x64x16xbf16, #tpu.memory_space<vmem>>, vector<1x64x16xbf16>
    %115 = vector.shape_cast %114 : vector<1x64x16xbf16> to vector<64x16xbf16>
    %cst_113 = arith.constant dense<0.000000e+00> : vector<2x16xf32>
    %116 = tpu.matmul %113, %115, %cst_113 {dimension_numbers = #tpu.dot_dimension_numbers<[1], [0], [0], [1], [0, 0, 1, 1], [], []>} : vector<2x64xbf16>, vector<64x16xbf16>, vector<2x16xf32> -> vector<2x16xf32>
    %c0_114 = arith.constant 0 : index
    %c0_115 = arith.constant 0 : index
    %117 = vector.load %arg21[%c0_114, %c0_115] : memref<4x64xf32, #tpu.memory_space<vmem>>, vector<2x64xf32>
    %118 = arith.truncf %117 : vector<2x64xf32> to vector<2x64xbf16>
    %c1_116 = arith.constant 1 : index
    %c0_117 = arith.constant 0 : index
    %c0_118 = arith.constant 0 : index
    %119 = vector.load %arg11[%c1_116, %c0_117, %c0_118] : memref<5x64x16xbf16, #tpu.memory_space<vmem>>, vector<1x64x16xbf16>
    %120 = vector.shape_cast %119 : vector<1x64x16xbf16> to vector<64x16xbf16>
    %cst_119 = arith.constant dense<0.000000e+00> : vector<2x16xf32>
    %121 = tpu.matmul %118, %120, %cst_119 {dimension_numbers = #tpu.dot_dimension_numbers<[1], [0], [0], [1], [0, 0, 1, 1], [], []>} : vector<2x64xbf16>, vector<64x16xbf16>, vector<2x16xf32> -> vector<2x16xf32>
    %122 = arith.addf %116, %121 : vector<2x16xf32>
    %c1_120 = arith.constant 1 : index
    %c0_121 = arith.constant 0 : index
    %123 = vector.load %arg20[%c1_120, %c0_121] : memref<4x64xf32, #tpu.memory_space<vmem>>, vector<2x64xf32>
    %124 = arith.truncf %123 : vector<2x64xf32> to vector<2x64xbf16>
    %c2_122 = arith.constant 2 : index
    %c0_123 = arith.constant 0 : index
    %c0_124 = arith.constant 0 : index
    %125 = vector.load %arg11[%c2_122, %c0_123, %c0_124] : memref<5x64x16xbf16, #tpu.memory_space<vmem>>, vector<1x64x16xbf16>
    %126 = vector.shape_cast %125 : vector<1x64x16xbf16> to vector<64x16xbf16>
    %cst_125 = arith.constant dense<0.000000e+00> : vector<2x16xf32>
    %127 = tpu.matmul %124, %126, %cst_125 {dimension_numbers = #tpu.dot_dimension_numbers<[1], [0], [0], [1], [0, 0, 1, 1], [], []>} : vector<2x64xbf16>, vector<64x16xbf16>, vector<2x16xf32> -> vector<2x16xf32>
    %128 = arith.addf %122, %127 : vector<2x16xf32>
    %c1_126 = arith.constant 1 : index
    %c0_127 = arith.constant 0 : index
    %129 = vector.load %arg21[%c1_126, %c0_127] : memref<4x64xf32, #tpu.memory_space<vmem>>, vector<2x64xf32>
    %130 = arith.truncf %129 : vector<2x64xf32> to vector<2x64xbf16>
    %c3_128 = arith.constant 3 : index
    %c0_129 = arith.constant 0 : index
    %c0_130 = arith.constant 0 : index
    %131 = vector.load %arg11[%c3_128, %c0_129, %c0_130] : memref<5x64x16xbf16, #tpu.memory_space<vmem>>, vector<1x64x16xbf16>
    %132 = vector.shape_cast %131 : vector<1x64x16xbf16> to vector<64x16xbf16>
    %cst_131 = arith.constant dense<0.000000e+00> : vector<2x16xf32>
    %133 = tpu.matmul %130, %132, %cst_131 {dimension_numbers = #tpu.dot_dimension_numbers<[1], [0], [0], [1], [0, 0, 1, 1], [], []>} : vector<2x64xbf16>, vector<64x16xbf16>, vector<2x16xf32> -> vector<2x16xf32>
    %134 = arith.addf %128, %133 : vector<2x16xf32>
    %c2_132 = arith.constant 2 : index
    %c0_133 = arith.constant 0 : index
    %135 = vector.load %arg20[%c2_132, %c0_133] : memref<4x64xf32, #tpu.memory_space<vmem>>, vector<2x64xf32>
    %136 = arith.truncf %135 : vector<2x64xf32> to vector<2x64xbf16>
    %c4_134 = arith.constant 4 : index
    %c0_135 = arith.constant 0 : index
    %c0_136 = arith.constant 0 : index
    %137 = vector.load %arg11[%c4_134, %c0_135, %c0_136] : memref<5x64x16xbf16, #tpu.memory_space<vmem>>, vector<1x64x16xbf16>
    %138 = vector.shape_cast %137 : vector<1x64x16xbf16> to vector<64x16xbf16>
    %cst_137 = arith.constant dense<0.000000e+00> : vector<2x16xf32>
    %139 = tpu.matmul %136, %138, %cst_137 {dimension_numbers = #tpu.dot_dimension_numbers<[1], [0], [0], [1], [0, 0, 1, 1], [], []>} : vector<2x64xbf16>, vector<64x16xbf16>, vector<2x16xf32> -> vector<2x16xf32>
    %140 = arith.addf %134, %139 : vector<2x16xf32>
    %c0_138 = arith.constant 0 : index
    %c0_139 = arith.constant 0 : index
    %141 = vector.load %arg12[%c0_138, %c0_139] : memref<1x16xf32, #tpu.memory_space<vmem>>, vector<1x16xf32>
    %142 = vector.broadcast %141 : vector<1x16xf32> to vector<2x16xf32>
    %143 = arith.addf %140, %142 : vector<2x16xf32>
    %144 = arith.mulf %143, %143 : vector<2x16xf32>
    %c0_140 = arith.constant 0 : index
    %c0_141 = arith.constant 0 : index
    %145 = vector.load %arg13[%c0_140, %c0_141] : memref<16x16xf32, #tpu.memory_space<vmem>>, vector<16x16xf32>
    %cst_142 = arith.constant dense<0.000000e+00> : vector<2x16xf32>
    %146 = tpu.matmul %144, %145, %cst_142 {dimension_numbers = #tpu.dot_dimension_numbers<[1], [0], [0], [1], [0, 0, 1, 1], [], []>} : vector<2x16xf32>, vector<16x16xf32>, vector<2x16xf32> -> vector<2x16xf32>
    %c0_143 = arith.constant 0 : index
    %c0_144 = arith.constant 0 : index
    %147 = vector.load %arg14[%c0_143, %c0_144] : memref<1x16xf32, #tpu.memory_space<vmem>>, vector<1x16xf32>
    %148 = vector.broadcast %147 : vector<1x16xf32> to vector<2x16xf32>
    %149 = arith.addf %146, %148 : vector<2x16xf32>
    %150 = math.rsqrt %149 : vector<2x16xf32>
    %151 = arith.mulf %143, %150 : vector<2x16xf32>
    %cst_145 = arith.constant 0.000000e+00 : f32
    %152 = vector.broadcast %cst_145 : f32 to vector<3x48xf32>
    %c0_146 = arith.constant 0 : index
    %c0_147 = arith.constant 0 : index
    %153 = vector.load %arg22[%c0_146, %c0_147] : memref<3x48xf32, #tpu.memory_space<vmem>>, vector<3x48xf32>
    tpu.vector_store %arg22[%c0_146, %c0_147], %152 {strides = array<i32>} : memref<3x48xf32, #tpu.memory_space<vmem>>, vector<3x48xf32>,
    %cst_148 = arith.constant 0.000000e+00 : f32
    %154 = vector.broadcast %cst_148 : f32 to vector<3x48xf32>
    %c0_149 = arith.constant 0 : index
    %c0_150 = arith.constant 0 : index
    %155 = vector.load %arg23[%c0_149, %c0_150] : memref<3x48xf32, #tpu.memory_space<vmem>>, vector<3x48xf32>
    tpu.vector_store %arg23[%c0_149, %c0_150], %154 {strides = array<i32>} : memref<3x48xf32, #tpu.memory_space<vmem>>, vector<3x48xf32>,
    %156 = vector.extract_strided_slice %151 {offsets = [0, 0], sizes = [1, 16], strides = [1, 1]} : vector<2x16xf32> to vector<1x16xf32>
    %c1_151 = arith.constant 1 : index
    %c16_152 = arith.constant 16 : index
    %157 = vector.load %arg22[%c1_151, %c16_152] : memref<3x48xf32, #tpu.memory_space<vmem>>, vector<1x16xf32>
    tpu.vector_store %arg22[%c1_151, %c16_152], %156 {strides = array<i32>} : memref<3x48xf32, #tpu.memory_space<vmem>>, vector<1x16xf32>,
    %158 = vector.extract_strided_slice %151 {offsets = [1, 0], sizes = [1, 16], strides = [1, 1]} : vector<2x16xf32> to vector<1x16xf32>
    %c1_153 = arith.constant 1 : index
    %c16_154 = arith.constant 16 : index
    %159 = vector.load %arg23[%c1_153, %c16_154] : memref<3x48xf32, #tpu.memory_space<vmem>>, vector<1x16xf32>
    tpu.vector_store %arg23[%c1_153, %c16_154], %158 {strides = array<i32>} : memref<3x48xf32, #tpu.memory_space<vmem>>, vector<1x16xf32>,
    %c0_155 = arith.constant 0 : index
    %c0_156 = arith.constant 0 : index
    %160 = vector.load %arg22[%c0_155, %c0_156] : memref<3x48xf32, #tpu.memory_space<vmem>>, vector<1x48xf32>
    %161 = arith.truncf %160 : vector<1x48xf32> to vector<1x48xbf16>
    %c0_157 = arith.constant 0 : index
    %c0_158 = arith.constant 0 : index
    %c0_159 = arith.constant 0 : index
    %162 = vector.load %arg15[%c0_157, %c0_158, %c0_159] : memref<5x48x4xbf16, #tpu.memory_space<vmem>>, vector<1x48x4xbf16>
    %163 = vector.shape_cast %162 : vector<1x48x4xbf16> to vector<48x4xbf16>
    %cst_160 = arith.constant dense<0.000000e+00> : vector<1x4xf32>
    %164 = tpu.matmul %161, %163, %cst_160 {dimension_numbers = #tpu.dot_dimension_numbers<[1], [0], [0], [1], [0, 0, 1, 1], [], []>} : vector<1x48xbf16>, vector<48x4xbf16>, vector<1x4xf32> -> vector<1x4xf32>
    %c0_161 = arith.constant 0 : index
    %c0_162 = arith.constant 0 : index
    %165 = vector.load %arg23[%c0_161, %c0_162] : memref<3x48xf32, #tpu.memory_space<vmem>>, vector<1x48xf32>
    %166 = arith.truncf %165 : vector<1x48xf32> to vector<1x48xbf16>
    %c1_163 = arith.constant 1 : index
    %c0_164 = arith.constant 0 : index
    %c0_165 = arith.constant 0 : index
    %167 = vector.load %arg15[%c1_163, %c0_164, %c0_165] : memref<5x48x4xbf16, #tpu.memory_space<vmem>>, vector<1x48x4xbf16>
    %168 = vector.shape_cast %167 : vector<1x48x4xbf16> to vector<48x4xbf16>
    %cst_166 = arith.constant dense<0.000000e+00> : vector<1x4xf32>
    %169 = tpu.matmul %166, %168, %cst_166 {dimension_numbers = #tpu.dot_dimension_numbers<[1], [0], [0], [1], [0, 0, 1, 1], [], []>} : vector<1x48xbf16>, vector<48x4xbf16>, vector<1x4xf32> -> vector<1x4xf32>
    %170 = arith.addf %164, %169 : vector<1x4xf32>
    %c1_167 = arith.constant 1 : index
    %c0_168 = arith.constant 0 : index
    %171 = vector.load %arg22[%c1_167, %c0_168] : memref<3x48xf32, #tpu.memory_space<vmem>>, vector<1x48xf32>
    %172 = arith.truncf %171 : vector<1x48xf32> to vector<1x48xbf16>
    %c2_169 = arith.constant 2 : index
    %c0_170 = arith.constant 0 : index
    %c0_171 = arith.constant 0 : index
    %173 = vector.load %arg15[%c2_169, %c0_170, %c0_171] : memref<5x48x4xbf16, #tpu.memory_space<vmem>>, vector<1x48x4xbf16>
    %174 = vector.shape_cast %173 : vector<1x48x4xbf16> to vector<48x4xbf16>
    %cst_172 = arith.constant dense<0.000000e+00> : vector<1x4xf32>
    %175 = tpu.matmul %172, %174, %cst_172 {dimension_numbers = #tpu.dot_dimension_numbers<[1], [0], [0], [1], [0, 0, 1, 1], [], []>} : vector<1x48xbf16>, vector<48x4xbf16>, vector<1x4xf32> -> vector<1x4xf32>
    %176 = arith.addf %170, %175 : vector<1x4xf32>
    %c1_173 = arith.constant 1 : index
    %c0_174 = arith.constant 0 : index
    %177 = vector.load %arg23[%c1_173, %c0_174] : memref<3x48xf32, #tpu.memory_space<vmem>>, vector<1x48xf32>
    %178 = arith.truncf %177 : vector<1x48xf32> to vector<1x48xbf16>
    %c3_175 = arith.constant 3 : index
    %c0_176 = arith.constant 0 : index
    %c0_177 = arith.constant 0 : index
    %179 = vector.load %arg15[%c3_175, %c0_176, %c0_177] : memref<5x48x4xbf16, #tpu.memory_space<vmem>>, vector<1x48x4xbf16>
    %180 = vector.shape_cast %179 : vector<1x48x4xbf16> to vector<48x4xbf16>
    %cst_178 = arith.constant dense<0.000000e+00> : vector<1x4xf32>
    %181 = tpu.matmul %178, %180, %cst_178 {dimension_numbers = #tpu.dot_dimension_numbers<[1], [0], [0], [1], [0, 0, 1, 1], [], []>} : vector<1x48xbf16>, vector<48x4xbf16>, vector<1x4xf32> -> vector<1x4xf32>
    %182 = arith.addf %176, %181 : vector<1x4xf32>
    %c2_179 = arith.constant 2 : index
    %c0_180 = arith.constant 0 : index
    %183 = vector.load %arg22[%c2_179, %c0_180] : memref<3x48xf32, #tpu.memory_space<vmem>>, vector<1x48xf32>
    %184 = arith.truncf %183 : vector<1x48xf32> to vector<1x48xbf16>
    %c4_181 = arith.constant 4 : index
    %c0_182 = arith.constant 0 : index
    %c0_183 = arith.constant 0 : index
    %185 = vector.load %arg15[%c4_181, %c0_182, %c0_183] : memref<5x48x4xbf16, #tpu.memory_space<vmem>>, vector<1x48x4xbf16>
    %186 = vector.shape_cast %185 : vector<1x48x4xbf16> to vector<48x4xbf16>
    %cst_184 = arith.constant dense<0.000000e+00> : vector<1x4xf32>
    %187 = tpu.matmul %184, %186, %cst_184 {dimension_numbers = #tpu.dot_dimension_numbers<[1], [0], [0], [1], [0, 0, 1, 1], [], []>} : vector<1x48xbf16>, vector<48x4xbf16>, vector<1x4xf32> -> vector<1x4xf32>
    %188 = arith.addf %182, %187 : vector<1x4xf32>
    %c0_185 = arith.constant 0 : index
    %c0_186 = arith.constant 0 : index
    %189 = vector.load %arg16[%c0_185, %c0_186] : memref<1x4xf32, #tpu.memory_space<vmem>>, vector<1x4xf32>
    %190 = arith.addf %188, %189 : vector<1x4xf32>
    %c0_187 = arith.constant 0 : index
    %c0_188 = arith.constant 0 : index
    %c0_189 = arith.constant 0 : index
    %191 = vector.load %arg17[%c0_187, %c0_188, %c0_189] : memref<1x1x4xf32, #tpu.memory_space<vmem>>, vector<1x1x4xf32>
    %192 = vector.shape_cast %191 : vector<1x1x4xf32> to vector<1x4xf32>
    %193 = vector.shape_cast %190 : vector<1x4xf32> to vector<1x1x4xf32>
    tpu.vector_store %arg17[%c0_187, %c0_188, %c0_189], %193 {strides = array<i32>} : memref<1x1x4xf32, #tpu.memory_space<vmem>>, vector<1x1x4xf32>,
    return
  }
  func.func @transform_0(%arg0: i32) -> (i32, i32, i32) {
    %c0_i32 = arith.constant 0 : i32
    %c0_i32_0 = arith.constant 0 : i32
    %c0_i32_1 = arith.constant 0 : i32
    return %arg0, %c0_i32, %c0_i32_0 : i32, i32, i32
  }
  func.func @transform_1(%arg0: i32) -> (i32, i32, i32) {
    %c0_i32 = arith.constant 0 : i32
    %c0_i32_0 = arith.constant 0 : i32
    %c0_i32_1 = arith.constant 0 : i32
    return %arg0, %c0_i32, %c0_i32_0 : i32, i32, i32
  }
  func.func @transform_2(%arg0: i32) -> (i32, i32, i32) {
    %c0_i32 = arith.constant 0 : i32
    %c0_i32_0 = arith.constant 0 : i32
    %c0_i32_1 = arith.constant 0 : i32
    %c0_i32_2 = arith.constant 0 : i32
    return %c0_i32, %c0_i32_0, %c0_i32_1 : i32, i32, i32
  }
  func.func @transform_3(%arg0: i32) -> (i32, i32) {
    %c0_i32 = arith.constant 0 : i32
    %c0_i32_0 = arith.constant 0 : i32
    %c0_i32_1 = arith.constant 0 : i32
    return %c0_i32, %c0_i32_0 : i32, i32
  }
  func.func @transform_4(%arg0: i32) -> (i32, i32) {
    %c0_i32 = arith.constant 0 : i32
    %c0_i32_0 = arith.constant 0 : i32
    %c0_i32_1 = arith.constant 0 : i32
    return %c0_i32, %c0_i32_0 : i32, i32
  }
  func.func @transform_5(%arg0: i32) -> (i32, i32) {
    %c0_i32 = arith.constant 0 : i32
    %c0_i32_0 = arith.constant 0 : i32
    %c0_i32_1 = arith.constant 0 : i32
    return %c0_i32, %c0_i32_0 : i32, i32
  }
  func.func @transform_6(%arg0: i32) -> (i32, i32, i32) {
    %c0_i32 = arith.constant 0 : i32
    %c0_i32_0 = arith.constant 0 : i32
    %c0_i32_1 = arith.constant 0 : i32
    %c0_i32_2 = arith.constant 0 : i32
    return %c0_i32, %c0_i32_0, %c0_i32_1 : i32, i32, i32
  }
  func.func @transform_7(%arg0: i32) -> (i32, i32) {
    %c0_i32 = arith.constant 0 : i32
    %c0_i32_0 = arith.constant 0 : i32
    %c0_i32_1 = arith.constant 0 : i32
    return %c0_i32, %c0_i32_0 : i32, i32
  }
  func.func @transform_8(%arg0: i32) -> (i32, i32) {
    %c0_i32 = arith.constant 0 : i32
    %c0_i32_0 = arith.constant 0 : i32
    %c0_i32_1 = arith.constant 0 : i32
    return %c0_i32, %c0_i32_0 : i32, i32
  }
  func.func @transform_9(%arg0: i32) -> (i32, i32) {
    %c0_i32 = arith.constant 0 : i32
    %c0_i32_0 = arith.constant 0 : i32
    %c0_i32_1 = arith.constant 0 : i32
    return %c0_i32, %c0_i32_0 : i32, i32
  }
  func.func @transform_10(%arg0: i32) -> (i32, i32, i32) {
    %c0_i32 = arith.constant 0 : i32
    %c0_i32_0 = arith.constant 0 : i32
    %c0_i32_1 = arith.constant 0 : i32
    %c0_i32_2 = arith.constant 0 : i32
    return %c0_i32, %c0_i32_0, %c0_i32_1 : i32, i32, i32
  }
  func.func @transform_11(%arg0: i32) -> (i32, i32) {
    %c0_i32 = arith.constant 0 : i32
    %c0_i32_0 = arith.constant 0 : i32
    %c0_i32_1 = arith.constant 0 : i32
    return %c0_i32, %c0_i32_0 : i32, i32
  }
  func.func @transform_12(%arg0: i32) -> (i32, i32) {
    %c0_i32 = arith.constant 0 : i32
    %c0_i32_0 = arith.constant 0 : i32
    %c0_i32_1 = arith.constant 0 : i32
    return %c0_i32, %c0_i32_0 : i32, i32
  }
  func.func @transform_13(%arg0: i32) -> (i32, i32) {
    %c0_i32 = arith.constant 0 : i32
    %c0_i32_0 = arith.constant 0 : i32
    %c0_i32_1 = arith.constant 0 : i32
    return %c0_i32, %c0_i32_0 : i32, i32
  }
  func.func @transform_14(%arg0: i32) -> (i32, i32, i32) {
    %c0_i32 = arith.constant 0 : i32
    %c0_i32_0 = arith.constant 0 : i32
    %c0_i32_1 = arith.constant 0 : i32
    %c0_i32_2 = arith.constant 0 : i32
    return %c0_i32, %c0_i32_0, %c0_i32_1 : i32, i32, i32
  }
  func.func @transform_15(%arg0: i32) -> (i32, i32) {
    %c0_i32 = arith.constant 0 : i32
    %c0_i32_0 = arith.constant 0 : i32
    %c0_i32_1 = arith.constant 0 : i32
    return %c0_i32, %c0_i32_0 : i32, i32
  }
  func.func @transform_16(%arg0: i32) -> (i32, i32, i32) {
    %c0_i32 = arith.constant 0 : i32
    %c0_i32_0 = arith.constant 0 : i32
    %c0_i32_1 = arith.constant 0 : i32
    return %arg0, %c0_i32, %c0_i32_0 : i32, i32, i32
  }
}

</mosaic_0001>

<llo_original>
// kernel: forward.1
$region0: #{forward.1}
  #allocation0 [shape = 'u32[]', space=smem, size = 0x4, offset = 0x4, fixed_abs, tag = 'smem constant byte address 0x4 - core index']
  #allocation1 [shape = 'u32[72,128]{1,0:T(1,128)}', space=vmem, size = 0x9000, scoped, tag = 'internal scratch']
  #allocation2 [shape = 'f32[6,96]{1,0:T(8,128)}', space=vmem, size = 0x1000, scoped, tag = 'scratch operand']
  #allocation3 [shape = 'f32[6,96]{1,0:T(8,128)}', space=vmem, size = 0x1000, scoped, tag = 'scratch operand']
  #allocation4 [shape = 'f32[4,64]{1,0:T(4,128)}', space=vmem, size = 0x800, scoped, tag = 'scratch operand']
  #allocation5 [shape = 'f32[4,64]{1,0:T(4,128)}', space=vmem, size = 0x800, scoped, tag = 'scratch operand']
  #allocation6 [shape = 'f32[3,48]{1,0:T(4,128)}', space=vmem, size = 0x800, scoped, tag = 'scratch operand']
  #allocation7 [shape = 'f32[3,48]{1,0:T(4,128)}', space=vmem, size = 0x800, scoped, tag = 'scratch operand']
  %s0 = inlined_call_operand.vmem [shape: bf16[2,10,60], index: 0, kind: input, shape index: {}]
  %s1 = inlined_call_operand.vmem [shape: bf16[2,10,60], index: 1, kind: input, shape index: {}]
  %s2 = inlined_call_operand.vmem [shape: bf16[5,60,64], index: 2, kind: input, shape index: {}]
  %s3 = inlined_call_operand.vmem [shape: f32[1,64], index: 3, kind: input, shape index: {}]
  %s4 = inlined_call_operand.vmem [shape: f32[64,64], index: 4, kind: input, shape index: {}]
  %s5 = inlined_call_operand.vmem [shape: f32[1,64], index: 5, kind: input, shape index: {}]
  %s6 = inlined_call_operand.vmem [shape: bf16[5,96,32], index: 6, kind: input, shape index: {}]
  %s7 = inlined_call_operand.vmem [shape: f32[1,32], index: 7, kind: input, shape index: {}]
  %s8 = inlined_call_operand.vmem [shape: f32[32,32], index: 8, kind: input, shape index: {}]
  %s9 = inlined_call_operand.vmem [shape: f32[1,32], index: 9, kind: input, shape index: {}]
  %s10 = inlined_call_operand.vmem [shape: bf16[5,64,16], index: 10, kind: input, shape index: {}]
  %s11 = inlined_call_operand.vmem [shape: f32[1,16], index: 11, kind: input, shape index: {}]
  %s12 = inlined_call_operand.vmem [shape: f32[16,16], index: 12, kind: input, shape index: {}]
  %s13 = inlined_call_operand.vmem [shape: f32[1,16], index: 13, kind: input, shape index: {}]
  %s14 = inlined_call_operand.vmem [shape: bf16[5,48,4], index: 14, kind: input, shape index: {}]
  %s15 = inlined_call_operand.vmem [shape: f32[1,4], index: 15, kind: input, shape index: {}]
  %s16 = inlined_call_operand.hbm [shape: f32[2,1,4], index: 16, kind: output, shape index: {}]
  %s17 = sld [smem:[#allocation0]]
  $region97: #{forward.1} parent=0
    _
  %s19 = ssub.s32 1, %s17
  %s20 = scalar_select 0, %s19, %s17
  $region1: #{forward.1} parent=0
    #allocation8 [shape = 'u8[1024]{0}', space=vmem, size = 0x400, scoped, tag = 'output window, operand 0']
    #allocation9 [shape = 's32[2]{0}', space=sflag, size = 0x8, scoped, tag = 'scoped memory for forward.1']
    %21 = vsyncpa [#allocation9], 0
    %s22 = scalar_lea.sflag [#allocation9], 1
    %23 = vsyncpa %s22, 0
    loop: start=0, step=1, limit=4
    $region2: #{forward.1} parent=1 // loop_pre_header
      _
    $region3: #{forward.1} parent=1 // loop_header
      %s25 = sphi 0, %s29
      %p26 = scmp.ge.s32.totalorder %s25, 4
      %s35 = sphi 0, %s37
      %s38 = sphi 0, %s35
      %s39 = sphi 0, %s38
      %s55 = sphi 0, %s39
      %s61 = sphi 0, %s63
      %s64 = sphi 0, %s61
      %s65 = sphi 0, %s64
      %s81 = sphi 0, %s65
      %s85 = sphi 0, %s85
      %s87 = sphi 0, %s85
      %s88 = sphi 0, %s87
      %s102 = sphi 0, %s88
      %s106 = sphi 0, %s106
      %s108 = sphi 0, %s106
      %s109 = sphi 0, %s108
      %s123 = sphi 0, %s109
      %s127 = sphi 0, %s127
      %s129 = sphi 0, %s127
      %s130 = sphi 0, %s129
      %s144 = sphi 0, %s130
      %s148 = sphi 0, %s148
      %s150 = sphi 0, %s148
      %s151 = sphi 0, %s150
      %s165 = sphi 0, %s151
      %s169 = sphi 0, %s169
      %s171 = sphi 0, %s169
      %s172 = sphi 0, %s171
      %s186 = sphi 0, %s172
      %s190 = sphi 0, %s190
      %s192 = sphi 0, %s190
      %s193 = sphi 0, %s192
      %s207 = sphi 0, %s193
      %s211 = sphi 0, %s211
      %s213 = sphi 0, %s211
      %s214 = sphi 0, %s213
      %s228 = sphi 0, %s214
      %s232 = sphi 0, %s232
      %s234 = sphi 0, %s232
      %s235 = sphi 0, %s234
      %s249 = sphi 0, %s235
      %s253 = sphi 0, %s253
      %s255 = sphi 0, %s253
      %s256 = sphi 0, %s255
      %s270 = sphi 0, %s256
      %s274 = sphi 0, %s274
      %s276 = sphi 0, %s274
      %s277 = sphi 0, %s276
      %s291 = sphi 0, %s277
      %s295 = sphi 0, %s295
      %s297 = sphi 0, %s295
      %s298 = sphi 0, %s297
      %s312 = sphi 0, %s298
      %s316 = sphi 0, %s316
      %s318 = sphi 0, %s316
      %s319 = sphi 0, %s318
      %s333 = sphi 0, %s319
      %s337 = sphi 0, %s337
      %s339 = sphi 0, %s337
      %s340 = sphi 0, %s339
      %s354 = sphi 0, %s340
      %s358 = sphi 0, %s358
      %s360 = sphi 0, %s358
      %s361 = sphi 0, %s360
      %s375 = sphi 0, %s361
      %s381 = sphi 0, %s383
      %s384 = sphi 0, %s381
      %s385 = sphi 0, %s384
      %s401 = sphi 0, %s385
    $region4: #{forward.1} parent=1 // loop_header_branch
      %28 = sbr.rel (%p26) target = $region8
    $region5: #{forward.1} parent=1 // loop_body
      %s30 = ssub.s32 %s25, 1
      %s31 = ssub.s32 %s25, 2
      %s32 = sadd.s32 %s25, 1
      %s33 = ssub.s32 %s25, %s32
      %p34 = scmp.eq.s32.totalorder %s33, 0
      %s36 = sadd.s32 %s35, 1
      %s37 = scalar_select %p34, %s35, %s36
      %p40 = pneg %p34
      %p41 = scmp.eq.s32.totalorder %s25, 1
      %p42 = por %p40, %p41
      %p43 = scmp.ne.s32.totalorder %s35, %s38
      %p44 = scmp.eq.s32.totalorder %s25, 0
      %p45 = por %p43, %p44
      %p46 = scmp.ne.s32.totalorder %s35, %s38
      %p47 = scmp.eq.s32.totalorder %s30, 1
      %p48 = por %p46, %p47
      %p49 = scmp.ne.s32.totalorder %s38, %s39
      %p50 = scmp.eq.s32.totalorder %s30, 0
      %p51 = por %p49, %p50
      %p52 = scmp.ne.s32.totalorder %s38, %s39
      %p53 = scmp.eq.s32.totalorder %s31, 1
      %p54 = por %p52, %p53
      %p56 = scmp.ne.s32.totalorder %s39, %s55
      %p57 = scmp.eq.s32.totalorder %s31, 0
      %p58 = por %p56, %p57
      %s59 = ssub.s32 %s25, %s32
      %p60 = scmp.eq.s32.totalorder %s59, 0
      %s62 = sadd.s32 %s61, 1
      %s63 = scalar_select %p60, %s61, %s62
      %p66 = pneg %p60
      %p67 = scmp.eq.s32.totalorder %s25, 1
      %p68 = por %p66, %p67
      %p69 = scmp.ne.s32.totalorder %s61, %s64
      %p70 = scmp.eq.s32.totalorder %s25, 0
      %p71 = por %p69, %p70
      %p72 = scmp.ne.s32.totalorder %s61, %s64
      %p73 = scmp.eq.s32.totalorder %s30, 1
      %p74 = por %p72, %p73
      %p75 = scmp.ne.s32.totalorder %s64, %s65
      %p76 = scmp.eq.s32.totalorder %s30, 0
      %p77 = por %p75, %p76
      %p78 = scmp.ne.s32.totalorder %s64, %s65
      %p79 = scmp.eq.s32.totalorder %s31, 1
      %p80 = por %p78, %p79
      %p82 = scmp.ne.s32.totalorder %s65, %s81
      %p83 = scmp.eq.s32.totalorder %s31, 0
      %p84 = por %p82, %p83
      %s86 = sadd.s32 %s85, 1
      %p89 = scmp.eq.s32.totalorder %s25, 1
      %p90 = scmp.ne.s32.totalorder %s85, %s87
      %p91 = scmp.eq.s32.totalorder %s25, 0
      %p92 = por %p90, %p91
      %p93 = scmp.ne.s32.totalorder %s85, %s87
      %p94 = scmp.eq.s32.totalorder %s30, 1
      %p95 = por %p93, %p94
      %p96 = scmp.ne.s32.totalorder %s87, %s88
      %p97 = scmp.eq.s32.totalorder %s30, 0
      %p98 = por %p96, %p97
      %p99 = scmp.ne.s32.totalorder %s87, %s88
      %p100 = scmp.eq.s32.totalorder %s31, 1
      %p101 = por %p99, %p100
      %p103 = scmp.ne.s32.totalorder %s88, %s102
      %p104 = scmp.eq.s32.totalorder %s31, 0
      %p105 = por %p103, %p104
      %s107 = sadd.s32 %s106, 1
      %p110 = scmp.eq.s32.totalorder %s25, 1
      %p111 = scmp.ne.s32.totalorder %s106, %s108
      %p112 = scmp.eq.s32.totalorder %s25, 0
      %p113 = por %p111, %p112
      %p114 = scmp.ne.s32.totalorder %s106, %s108
      %p115 = scmp.eq.s32.totalorder %s30, 1
      %p116 = por %p114, %p115
      %p117 = scmp.ne.s32.totalorder %s108, %s109
      %p118 = scmp.eq.s32.totalorder %s30, 0
      %p119 = por %p117, %p118
      %p120 = scmp.ne.s32.totalorder %s108, %s109
      %p121 = scmp.eq.s32.totalorder %s31, 1
      %p122 = por %p120, %p121
      %p124 = scmp.ne.s32.totalorder %s109, %s123
      %p125 = scmp.eq.s32.totalorder %s31, 0
      %p126 = por %p124, %p125
      %s128 = sadd.s32 %s127, 1
      %p131 = scmp.eq.s32.totalorder %s25, 1
      %p132 = scmp.ne.s32.totalorder %s127, %s129
      %p133 = scmp.eq.s32.totalorder %s25, 0
      %p134 = por %p132, %p133
      %p135 = scmp.ne.s32.totalorder %s127, %s129
      %p136 = scmp.eq.s32.totalorder %s30, 1
      %p137 = por %p135, %p136
      %p138 = scmp.ne.s32.totalorder %s129, %s130
      %p139 = scmp.eq.s32.totalorder %s30, 0
      %p140 = por %p138, %p139
      %p141 = scmp.ne.s32.totalorder %s129, %s130
      %p142 = scmp.eq.s32.totalorder %s31, 1
      %p143 = por %p141, %p142
      %p145 = scmp.ne.s32.totalorder %s130, %s144
      %p146 = scmp.eq.s32.totalorder %s31, 0
      %p147 = por %p145, %p146
      %s149 = sadd.s32 %s148, 1
      %p152 = scmp.eq.s32.totalorder %s25, 1
      %p153 = scmp.ne.s32.totalorder %s148, %s150
      %p154 = scmp.eq.s32.totalorder %s25, 0
      %p155 = por %p153, %p154
      %p156 = scmp.ne.s32.totalorder %s148, %s150
      %p157 = scmp.eq.s32.totalorder %s30, 1
      %p158 = por %p156, %p157
      %p159 = scmp.ne.s32.totalorder %s150, %s151
      %p160 = scmp.eq.s32.totalorder %s30, 0
      %p161 = por %p159, %p160
      %p162 = scmp.ne.s32.totalorder %s150, %s151
      %p163 = scmp.eq.s32.totalorder %s31, 1
      %p164 = por %p162, %p163
      %p166 = scmp.ne.s32.totalorder %s151, %s165
      %p167 = scmp.eq.s32.totalorder %s31, 0
      %p168 = por %p166, %p167
      %s170 = sadd.s32 %s169, 1
      %p173 = scmp.eq.s32.totalorder %s25, 1
      %p174 = scmp.ne.s32.totalorder %s169, %s171
      %p175 = scmp.eq.s32.totalorder %s25, 0
      %p176 = por %p174, %p175
      %p177 = scmp.ne.s32.totalorder %s169, %s171
      %p178 = scmp.eq.s32.totalorder %s30, 1
      %p179 = por %p177, %p178
      %p180 = scmp.ne.s32.totalorder %s171, %s172
      %p181 = scmp.eq.s32.totalorder %s30, 0
      %p182 = por %p180, %p181
      %p183 = scmp.ne.s32.totalorder %s171, %s172
      %p184 = scmp.eq.s32.totalorder %s31, 1
      %p185 = por %p183, %p184
      %p187 = scmp.ne.s32.totalorder %s172, %s186
      %p188 = scmp.eq.s32.totalorder %s31, 0
      %p189 = por %p187, %p188
      %s191 = sadd.s32 %s190, 1
      %p194 = scmp.eq.s32.totalorder %s25, 1
      %p195 = scmp.ne.s32.totalorder %s190, %s192
      %p196 = scmp.eq.s32.totalorder %s25, 0
      %p197 = por %p195, %p196
      %p198 = scmp.ne.s32.totalorder %s190, %s192
      %p199 = scmp.eq.s32.totalorder %s30, 1
      %p200 = por %p198, %p199
      %p201 = scmp.ne.s32.totalorder %s192, %s193
      %p202 = scmp.eq.s32.totalorder %s30, 0
      %p203 = por %p201, %p202
      %p204 = scmp.ne.s32.totalorder %s192, %s193
      %p205 = scmp.eq.s32.totalorder %s31, 1
      %p206 = por %p204, %p205
      %p208 = scmp.ne.s32.totalorder %s193, %s207
      %p209 = scmp.eq.s32.totalorder %s31, 0
      %p210 = por %p208, %p209
      %s212 = sadd.s32 %s211, 1
      %p215 = scmp.eq.s32.totalorder %s25, 1
      %p216 = scmp.ne.s32.totalorder %s211, %s213
      %p217 = scmp.eq.s32.totalorder %s25, 0
      %p218 = por %p216, %p217
      %p219 = scmp.ne.s32.totalorder %s211, %s213
      %p220 = scmp.eq.s32.totalorder %s30, 1
      %p221 = por %p219, %p220
      %p222 = scmp.ne.s32.totalorder %s213, %s214
      %p223 = scmp.eq.s32.totalorder %s30, 0
      %p224 = por %p222, %p223
      %p225 = scmp.ne.s32.totalorder %s213, %s214
      %p226 = scmp.eq.s32.totalorder %s31, 1
      %p227 = por %p225, %p226
      %p229 = scmp.ne.s32.totalorder %s214, %s228
      %p230 = scmp.eq.s32.totalorder %s31, 0
      %p231 = por %p229, %p230
      %s233 = sadd.s32 %s232, 1
      %p236 = scmp.eq.s32.totalorder %s25, 1
      %p237 = scmp.ne.s32.totalorder %s232, %s234
      %p238 = scmp.eq.s32.totalorder %s25, 0
      %p239 = por %p237, %p238
      %p240 = scmp.ne.s32.totalorder %s232, %s234
      %p241 = scmp.eq.s32.totalorder %s30, 1
      %p242 = por %p240, %p241
      %p243 = scmp.ne.s32.totalorder %s234, %s235
      %p244 = scmp.eq.s32.totalorder %s30, 0
      %p245 = por %p243, %p244
      %p246 = scmp.ne.s32.totalorder %s234, %s235
      %p247 = scmp.eq.s32.totalorder %s31, 1
      %p248 = por %p246, %p247
      %p250 = scmp.ne.s32.totalorder %s235, %s249
      %p251 = scmp.eq.s32.totalorder %s31, 0
      %p252 = por %p250, %p251
      %s254 = sadd.s32 %s253, 1
      %p257 = scmp.eq.s32.totalorder %s25, 1
      %p258 = scmp.ne.s32.totalorder %s253, %s255
      %p259 = scmp.eq.s32.totalorder %s25, 0
      %p260 = por %p258, %p259
      %p261 = scmp.ne.s32.totalorder %s253, %s255
      %p262 = scmp.eq.s32.totalorder %s30, 1
      %p263 = por %p261, %p262
      %p264 = scmp.ne.s32.totalorder %s255, %s256
      %p265 = scmp.eq.s32.totalorder %s30, 0
      %p266 = por %p264, %p265
      %p267 = scmp.ne.s32.totalorder %s255, %s256
      %p268 = scmp.eq.s32.totalorder %s31, 1
      %p269 = por %p267, %p268
      %p271 = scmp.ne.s32.totalorder %s256, %s270
      %p272 = scmp.eq.s32.totalorder %s31, 0
      %p273 = por %p271, %p272
      %s275 = sadd.s32 %s274, 1
      %p278 = scmp.eq.s32.totalorder %s25, 1
      %p279 = scmp.ne.s32.totalorder %s274, %s276
      %p280 = scmp.eq.s32.totalorder %s25, 0
      %p281 = por %p279, %p280
      %p282 = scmp.ne.s32.totalorder %s274, %s276
      %p283 = scmp.eq.s32.totalorder %s30, 1
      %p284 = por %p282, %p283
      %p285 = scmp.ne.s32.totalorder %s276, %s277
      %p286 = scmp.eq.s32.totalorder %s30, 0
      %p287 = por %p285, %p286
      %p288 = scmp.ne.s32.totalorder %s276, %s277
      %p289 = scmp.eq.s32.totalorder %s31, 1
      %p290 = por %p288, %p289
      %p292 = scmp.ne.s32.totalorder %s277, %s291
      %p293 = scmp.eq.s32.totalorder %s31, 0
      %p294 = por %p292, %p293
      %s296 = sadd.s32 %s295, 1
      %p299 = scmp.eq.s32.totalorder %s25, 1
      %p300 = scmp.ne.s32.totalorder %s295, %s297
      %p301 = scmp.eq.s32.totalorder %s25, 0
      %p302 = por %p300, %p301
      %p303 = scmp.ne.s32.totalorder %s295, %s297
      %p304 = scmp.eq.s32.totalorder %s30, 1
      %p305 = por %p303, %p304
      %p306 = scmp.ne.s32.totalorder %s297, %s298
      %p307 = scmp.eq.s32.totalorder %s30, 0
      %p308 = por %p306, %p307
      %p309 = scmp.ne.s32.totalorder %s297, %s298
      %p310 = scmp.eq.s32.totalorder %s31, 1
      %p311 = por %p309, %p310
      %p313 = scmp.ne.s32.totalorder %s298, %s312
      %p314 = scmp.eq.s32.totalorder %s31, 0
      %p315 = por %p313, %p314
      %s317 = sadd.s32 %s316, 1
      %p320 = scmp.eq.s32.totalorder %s25, 1
      %p321 = scmp.ne.s32.totalorder %s316, %s318
      %p322 = scmp.eq.s32.totalorder %s25, 0
      %p323 = por %p321, %p322
      %p324 = scmp.ne.s32.totalorder %s316, %s318
      %p325 = scmp.eq.s32.totalorder %s30, 1
      %p326 = por %p324, %p325
      %p327 = scmp.ne.s32.totalorder %s318, %s319
      %p328 = scmp.eq.s32.totalorder %s30, 0
      %p329 = por %p327, %p328
      %p330 = scmp.ne.s32.totalorder %s318, %s319
      %p331 = scmp.eq.s32.totalorder %s31, 1
      %p332 = por %p330, %p331
      %p334 = scmp.ne.s32.totalorder %s319, %s333
      %p335 = scmp.eq.s32.totalorder %s31, 0
      %p336 = por %p334, %p335
      %s338 = sadd.s32 %s337, 1
      %p341 = scmp.eq.s32.totalorder %s25, 1
      %p342 = scmp.ne.s32.totalorder %s337, %s339
      %p343 = scmp.eq.s32.totalorder %s25, 0
      %p344 = por %p342, %p343
      %p345 = scmp.ne.s32.totalorder %s337, %s339
      %p346 = scmp.eq.s32.totalorder %s30, 1
      %p347 = por %p345, %p346
      %p348 = scmp.ne.s32.totalorder %s339, %s340
      %p349 = scmp.eq.s32.totalorder %s30, 0
      %p350 = por %p348, %p349
      %p351 = scmp.ne.s32.totalorder %s339, %s340
      %p352 = scmp.eq.s32.totalorder %s31, 1
      %p353 = por %p351, %p352
      %p355 = scmp.ne.s32.totalorder %s340, %s354
      %p356 = scmp.eq.s32.totalorder %s31, 0
      %p357 = por %p355, %p356
      %s359 = sadd.s32 %s358, 1
      %p362 = scmp.eq.s32.totalorder %s25, 1
      %p363 = scmp.ne.s32.totalorder %s358, %s360
      %p364 = scmp.eq.s32.totalorder %s25, 0
      %p365 = por %p363, %p364
      %p366 = scmp.ne.s32.totalorder %s358, %s360
      %p367 = scmp.eq.s32.totalorder %s30, 1
      %p368 = por %p366, %p367
      %p369 = scmp.ne.s32.totalorder %s360, %s361
      %p370 = scmp.eq.s32.totalorder %s30, 0
      %p371 = por %p369, %p370
      %p372 = scmp.ne.s32.totalorder %s360, %s361
      %p373 = scmp.eq.s32.totalorder %s31, 1
      %p374 = por %p372, %p373
      %p376 = scmp.ne.s32.totalorder %s361, %s375
      %p377 = scmp.eq.s32.totalorder %s31, 0
      %p378 = por %p376, %p377
      %s379 = ssub.s32 %s25, %s32
      %p380 = scmp.eq.s32.totalorder %s379, 0
      %s382 = sadd.s32 %s381, 1
      %s383 = scalar_select %p380, %s381, %s382
      %p386 = pneg %p380
      %p387 = scmp.eq.s32.totalorder %s25, 1
      %p388 = por %p386, %p387
      %p389 = scmp.ne.s32.totalorder %s381, %s384
      %p390 = scmp.eq.s32.totalorder %s25, 0
      %p391 = por %p389, %p390
      %p392 = scmp.ne.s32.totalorder %s381, %s384
      %p393 = scmp.eq.s32.totalorder %s30, 1
      %p394 = por %p392, %p393
      %p395 = scmp.ne.s32.totalorder %s384, %s385
      %p396 = scmp.eq.s32.totalorder %s30, 0
      %p397 = por %p395, %p396
      %p398 = scmp.ne.s32.totalorder %s384, %s385
      %p399 = scmp.eq.s32.totalorder %s31, 1
      %p400 = por %p398, %p399
      %p402 = scmp.ne.s32.totalorder %s385, %s401
      %p403 = scmp.eq.s32.totalorder %s31, 0
      %p404 = por %p402, %p403
      %p405 = scmp.le.s32.totalorder 1, %s25
      %p406 = scmp.lt.s32.totalorder %s25, 3
      %p407 = pnand %p405, %p406
      %p408 = pneg %p407
      // Predicated region
      $region9: #{forward.1} parent=5 // pred_check
        _
      $region10: #{forward.1} parent=5 // pred_check_branch
        %410 = sbr.rel (%p407) target = $region12
      $region11: #{forward.1} parent=5 // pred_region
        %s411 = ssub.s32 %s25, 1
        // Predicated region
        $region13: #{forward.1} parent=11 // pred_check
          %p412 = pneg %p98
        $region14: #{forward.1} parent=11 // pred_check_branch
          %414 = sbr.rel (%p412) target = $region16
        $region15: #{forward.1} parent=11 // pred_region
          _
        $region16: #{forward.1} parent=11 // pred_fallthru
          _
        // Predicated region
        $region17: #{forward.1} parent=11 // pred_check
          %p415 = pneg %p119
        $region18: #{forward.1} parent=11 // pred_check_branch
          %417 = sbr.rel (%p415) target = $region20
        $region19: #{forward.1} parent=11 // pred_region
          _
        $region20: #{forward.1} parent=11 // pred_fallthru
          _
        // Predicated region
        $region21: #{forward.1} parent=11 // pred_check
          %p418 = pneg %p140
        $region22: #{forward.1} parent=11 // pred_check_branch
          %420 = sbr.rel (%p418) target = $region24
        $region23: #{forward.1} parent=11 // pred_region
          _
        $region24: #{forward.1} parent=11 // pred_fallthru
          _
        // Predicated region
        $region25: #{forward.1} parent=11 // pred_check
          %p421 = pneg %p161
        $region26: #{forward.1} parent=11 // pred_check_branch
          %423 = sbr.rel (%p421) target = $region28
        $region27: #{forward.1} parent=11 // pred_region
          _
        $region28: #{forward.1} parent=11 // pred_fallthru
          _
        // Predicated region
        $region29: #{forward.1} parent=11 // pred_check
          %p424 = pneg %p182
        $region30: #{forward.1} parent=11 // pred_check_branch
          %426 = sbr.rel (%p424) target = $region32
        $region31: #{forward.1} parent=11 // pred_region
          _
        $region32: #{forward.1} parent=11 // pred_fallthru
          _
        // Predicated region
        $region33: #{forward.1} parent=11 // pred_check
          %p427 = pneg %p203
        $region34: #{forward.1} parent=11 // pred_check_branch
          %429 = sbr.rel (%p427) target = $region36
        $region35: #{forward.1} parent=11 // pred_region
          _
        $region36: #{forward.1} parent=11 // pred_fallthru
          _
        // Predicated region
        $region37: #{forward.1} parent=11 // pred_check
          %p430 = pneg %p224
        $region38: #{forward.1} parent=11 // pred_check_branch
          %432 = sbr.rel (%p430) target = $region40
        $region39: #{forward.1} parent=11 // pred_region
          _
        $region40: #{forward.1} parent=11 // pred_fallthru
          _
        // Predicated region
        $region41: #{forward.1} parent=11 // pred_check
          %p433 = pneg %p245
        $region42: #{forward.1} parent=11 // pred_check_branch
          %435 = sbr.rel (%p433) target = $region44
        $region43: #{forward.1} parent=11 // pred_region
          _
        $region44: #{forward.1} parent=11 // pred_fallthru
          _
        // Predicated region
        $region45: #{forward.1} parent=11 // pred_check
          %p436 = pneg %p266
        $region46: #{forward.1} parent=11 // pred_check_branch
          %438 = sbr.rel (%p436) target = $region48
        $region47: #{forward.1} parent=11 // pred_region
          _
        $region48: #{forward.1} parent=11 // pred_fallthru
          _
        // Predicated region
        $region49: #{forward.1} parent=11 // pred_check
          %p439 = pneg %p287
        $region50: #{forward.1} parent=11 // pred_check_branch
          %441 = sbr.rel (%p439) target = $region52
        $region51: #{forward.1} parent=11 // pred_region
          _
        $region52: #{forward.1} parent=11 // pred_fallthru
          _
        // Predicated region
        $region53: #{forward.1} parent=11 // pred_check
          %p442 = pneg %p308
        $region54: #{forward.1} parent=11 // pred_check_branch
          %444 = sbr.rel (%p442) target = $region56
        $region55: #{forward.1} parent=11 // pred_region
          _
        $region56: #{forward.1} parent=11 // pred_fallthru
          _
        // Predicated region
        $region57: #{forward.1} parent=11 // pred_check
          %p445 = pneg %p329
        $region58: #{forward.1} parent=11 // pred_check_branch
          %447 = sbr.rel (%p445) target = $region60
        $region59: #{forward.1} parent=11 // pred_region
          _
        $region60: #{forward.1} parent=11 // pred_fallthru
          _
        // Predicated region
        $region61: #{forward.1} parent=11 // pred_check
          %p448 = pneg %p350
        $region62: #{forward.1} parent=11 // pred_check_branch
          %450 = sbr.rel (%p448) target = $region64
        $region63: #{forward.1} parent=11 // pred_region
          _
        $region64: #{forward.1} parent=11 // pred_fallthru
          _
        // Predicated region
        $region65: #{forward.1} parent=11 // pred_check
          %p451 = pneg %p371
        $region66: #{forward.1} parent=11 // pred_check_branch
          %453 = sbr.rel (%p451) target = $region68
        $region67: #{forward.1} parent=11 // pred_region
          _
        $region68: #{forward.1} parent=11 // pred_fallthru
          _
      $region12: #{forward.1} parent=5 // pred_fallthru
        _
      %p454 = scmp.lt.s32.totalorder %s25, 2
      // Predicated region
      $region69: #{forward.1} parent=5 // pred_check
        %p455 = pneg %p454
      $region70: #{forward.1} parent=5 // pred_check_branch
        %457 = sbr.rel (%p455) target = $region72
      $region71: #{forward.1} parent=5 // pred_region
        // Predicated region
        $region73: #{forward.1} parent=71 // pred_check
          %p458 = pneg %p45
        $region74: #{forward.1} parent=71 // pred_check_branch
          %460 = sbr.rel (%p458) target = $region76
        $region75: #{forward.1} parent=71 // pred_region
          %p461 = scmp.lt.s32.totalorder %s25, 1
          %s462 = scalar_select %p461, %s25, 1
          %s463 = smul.addr %s462, 2
          %s464 = smul.addr %s463, 4
          %s465 = scalar_lea.vmem %s0, %s464
        $region76: #{forward.1} parent=71 // pred_fallthru
          _
        // Predicated region
        $region77: #{forward.1} parent=71 // pred_check
          %p466 = pneg %p71
        $region78: #{forward.1} parent=71 // pred_check_branch
          %468 = sbr.rel (%p466) target = $region80
        $region79: #{forward.1} parent=71 // pred_region
          %p469 = scmp.lt.s32.totalorder %s25, 1
          %s470 = scalar_select %p469, %s25, 1
          %s471 = smul.addr %s470, 2
          %s472 = smul.addr %s471, 4
          %s473 = scalar_lea.vmem %s1, %s472
        $region80: #{forward.1} parent=71 // pred_fallthru
          _
      $region72: #{forward.1} parent=5 // pred_fallthru
        _
      %p474 = scmp.le.s32.totalorder 1, %s25
      %p475 = scmp.lt.s32.totalorder %s25, 3
      %p476 = pnand %p474, %p475
      %p477 = pneg %p476
      // Predicated region
      $region81: #{forward.1} parent=5 // pred_check
        _
      $region82: #{forward.1} parent=5 // pred_check_branch
        %479 = sbr.rel (%p476) target = $region84
      $region83: #{forward.1} parent=5 // pred_region
        %s480 = ssub.s32 %s25, 1
        %p481 = scmp.lt.s32.totalorder %s30, 1
        %s482 = scalar_select %p481, %s30, 1
        %s483 = smul.addr %s482, 2
        %s484 = smul.addr %s483, 4
        %s485 = scalar_lea.vmem %s0, %s484
        %p486 = pneg %p51
        %p487 = pneg %p48
        %p488 = scmp.lt.s32.totalorder %s30, 1
        %s489 = scalar_select %p488, %s30, 1
        %s490 = smul.addr %s489, 2
        %s491 = smul.addr %s490, 4
        %s492 = scalar_lea.vmem %s1, %s491
        %p493 = pneg %p77
        %p494 = pneg %p74
        %p495 = pneg %p98
        %p496 = pneg %p95
        %p497 = pneg %p119
        %p498 = pneg %p116
        %p499 = pneg %p140
        %p500 = pneg %p137
        %p501 = pneg %p161
        %p502 = pneg %p158
        %p503 = pneg %p182
        %p504 = pneg %p179
        %p505 = pneg %p203
        %p506 = pneg %p200
        %p507 = pneg %p224
        %p508 = pneg %p221
        %p509 = pneg %p245
        %p510 = pneg %p242
        %p511 = pneg %p266
        %p512 = pneg %p263
        %p513 = pneg %p287
        %p514 = pneg %p284
        %p515 = pneg %p308
        %p516 = pneg %p305
        %p517 = pneg %p329
        %p518 = pneg %p326
        %p519 = pneg %p350
        %p520 = pneg %p347
        %p521 = pneg %p371
        %p522 = pneg %p368
        %p523 = pneg %p397
        %p524 = pneg %p394
        %s525 = sand.u32 %s384, 1
        %s526 = scalar_lea.sflag [#allocation9], %s525
        %s527 = sand.u32 %s384, 1
        %s528 = scalar_lea.vmem [#allocation8], %s527
        %p529 = scmp.lt.s32.totalorder %s30, 1
        %s530 = scalar_select %p529, %s30, 1
        %s531 = smul.addr %s530, 2
        %s532 = smul.addr %s531, 4
        %s533 = scalar_lea.vmem %s0, %s532
        %p534 = scmp.lt.s32.totalorder %s30, 1
        %s535 = scalar_select %p534, %s30, 1
        %s536 = smul.addr %s535, 2
        %s537 = smul.addr %s536, 4
        %s538 = scalar_lea.vmem %s1, %s537
        %v540 = vld [vmem:[%s533] sm:$0xf]
        %v541 = vld [vmem:[%s2] sm:$0xf]
        %v542 = vld [vmem:[%s2 + $0x4] sm:$0xf]
        %v543 = vld [vmem:[%s2 + $0x8] sm:$0xf]
        %v544 = vld [vmem:[%s2 + $0xc] sm:$0xf]
        %v545 = vld [vmem:[%s2 + $0x10] sm:$0xf]
        %v546 = vld [vmem:[%s2 + $0x14] sm:$0xf]
        %v547 = vld [vmem:[%s2 + $0x18] sm:$0xf]
        %v548 = vld [vmem:[%s2 + $0x1c] sm:$0x3]
        %v549 = vld [vmem:[%s538] sm:$0xf]
        %s550 = scalar_lea.vmem %s2, 32
        %v551 = vld [vmem:[%s550] sm:$0xf]
        %v552 = vld [vmem:[%s550 + $0x4] sm:$0xf]
        %v553 = vld [vmem:[%s550 + $0x8] sm:$0xf]
        %v554 = vld [vmem:[%s550 + $0xc] sm:$0xf]
        %v555 = vld [vmem:[%s550 + $0x10] sm:$0xf]
        %v556 = vld [vmem:[%s550 + $0x14] sm:$0xf]
        %v557 = vld [vmem:[%s550 + $0x18] sm:$0xf]
        %v558 = vld [vmem:[%s550 + $0x1c] sm:$0x3]
        %v567 = vunpack.c.l.b16 %v551
        %v568 = vunpack.c.l.b16 %v552
        %v569 = vunpack.c.l.b16 %v553
        %v570 = vunpack.c.l.b16 %v554
        %v571 = vunpack.c.l.b16 %v555
        %v572 = vunpack.c.l.b16 %v556
        %v573 = vunpack.c.l.b16 %v557
        %v574 = vunpack.c.l.b16 %v558
        %v575 = vpack.c.b16 %v568, %v567
        %v576 = vpack.c.b16 %v570, %v569
        %v577 = vpack.c.b16 %v572, %v571
        %v578 = vpack.c.b16 %v574, %v573
        %vm582 = vcmask 490496
        %v584 = vsel %vm582, %v549, 0
        %vm586 = vcmask 1045504
        %v588 = vsel %vm586, %v578, 0
        %590 = vmatpush.bf16.msra.mxu0 0
        %591 = vmatpush.bf16.msra.mxu0 0
        %592 = vmatpush.bf16.msra.mxu0 0
        %593 = vmatpush.bf16.msra.mxu0 0
        %594 = vmatpush.bf16.msra.mxu0 %v588
        %595 = vmatpush.bf16.msra.mxu0 %v577
        %596 = vmatpush.bf16.msra.mxu0 %v576
        %597 = vmatpush.bf16.msra.mxu0 %v575
        %598 = vmatmul.bf16.gmra.mxu0 %v584
        %v599 = vpop.f32.mrf.mxu0
        %v600 = vadd.f32 0.0, %v599
        %v601 = vpop.f32.mrf.mxu0
        %602 = vdwg.mxu0
        %v611 = vunpack.c.l.b16 %v541
        %v612 = vunpack.c.l.b16 %v542
        %v613 = vunpack.c.l.b16 %v543
        %v614 = vunpack.c.l.b16 %v544
        %v615 = vunpack.c.l.b16 %v545
        %v616 = vunpack.c.l.b16 %v546
        %v617 = vunpack.c.l.b16 %v547
        %v618 = vunpack.c.l.b16 %v548
        %v619 = vpack.c.b16 %v612, %v611
        %v620 = vpack.c.b16 %v614, %v613
        %v621 = vpack.c.b16 %v616, %v615
        %v622 = vpack.c.b16 %v618, %v617
        %v627 = vsel %vm582, %v540, 0
        %v630 = vsel %vm586, %v622, 0
        %632 = vmatpush.bf16.msra.mxu0 0
        %633 = vmatpush.bf16.msra.mxu0 0
        %634 = vmatpush.bf16.msra.mxu0 0
        %635 = vmatpush.bf16.msra.mxu0 0
        %636 = vmatpush.bf16.msra.mxu0 %v630
        %637 = vmatpush.bf16.msra.mxu0 %v621
        %638 = vmatpush.bf16.msra.mxu0 %v620
        %639 = vmatpush.bf16.msra.mxu0 %v619
        %640 = vmatmul.bf16.gmra.mxu0 %v627
        %v641 = vpop.f32.mrf.mxu0
        %v642 = vadd.f32 %v600, %v641
        %v643 = vpop.f32.mrf.mxu0
        %644 = vdwg.mxu0
        %v645 = vld [vmem:[%s533] sm:$0xf]
        %v646 = vld [vmem:[%s533 + $0x4] sm:$0x1]
        %s647 = scalar_lea.vmem %s2, 64
        %v648 = vld [vmem:[%s647] sm:$0xf]
        %v649 = vld [vmem:[%s647 + $0x4] sm:$0xf]
        %v650 = vld [vmem:[%s647 + $0x8] sm:$0xf]
        %v651 = vld [vmem:[%s647 + $0xc] sm:$0xf]
        %v652 = vld [vmem:[%s647 + $0x10] sm:$0xf]
        %v653 = vld [vmem:[%s647 + $0x14] sm:$0xf]
        %v654 = vld [vmem:[%s647 + $0x18] sm:$0xf]
        %v655 = vld [vmem:[%s647 + $0x1c] sm:$0x3]
        %v658 = vunpack.c.l.b16 %v645
        %v659 = vunpack.c.l.b16 %v646
        %v660 = vpack.c.b16 %v659, %v658
        %v662 = vshrl.u32 %v660, 16
        %v664 = vshll.u32 %v660, 16
        %v666 = vrot.slane %v664, 1
        %v667 = vor.u32 %v662, %v666
        %v676 = vunpack.c.l.b16 %v648
        %v677 = vunpack.c.l.b16 %v649
        %v678 = vunpack.c.l.b16 %v650
        %v679 = vunpack.c.l.b16 %v651
        %v680 = vunpack.c.l.b16 %v652
        %v681 = vunpack.c.l.b16 %v653
        %v682 = vunpack.c.l.b16 %v654
        %v683 = vunpack.c.l.b16 %v655
        %v684 = vpack.c.b16 %v677, %v676
        %v685 = vpack.c.b16 %v679, %v678
        %v686 = vpack.c.b16 %v681, %v680
        %v687 = vpack.c.b16 %v683, %v682
        %v692 = vsel %vm582, %v667, 0
        %v695 = vsel %vm586, %v687, 0
        %697 = vmatpush.bf16.msra.mxu0 0
        %698 = vmatpush.bf16.msra.mxu0 0
        %699 = vmatpush.bf16.msra.mxu0 0
        %700 = vmatpush.bf16.msra.mxu0 0
        %701 = vmatpush.bf16.msra.mxu0 %v695
        %702 = vmatpush.bf16.msra.mxu0 %v686
        %703 = vmatpush.bf16.msra.mxu0 %v685
        %704 = vmatpush.bf16.msra.mxu0 %v684
        %705 = vmatmul.bf16.gmra.mxu0 %v692
        %v706 = vpop.f32.mrf.mxu0
        %v707 = vadd.f32 0.0, %v706
        %v708 = vpop.f32.mrf.mxu0
        %709 = vdwg.mxu0
        %v710 = vadd.f32 %v642, %v707
        %v711 = vld [vmem:[%s538] sm:$0xf]
        %v712 = vld [vmem:[%s538 + $0x4] sm:$0x1]
        %s713 = scalar_lea.vmem %s2, 96
        %v714 = vld [vmem:[%s713] sm:$0xf]
        %v715 = vld [vmem:[%s713 + $0x4] sm:$0xf]
        %v716 = vld [vmem:[%s713 + $0x8] sm:$0xf]
        %v717 = vld [vmem:[%s713 + $0xc] sm:$0xf]
        %v718 = vld [vmem:[%s713 + $0x10] sm:$0xf]
        %v719 = vld [vmem:[%s713 + $0x14] sm:$0xf]
        %v720 = vld [vmem:[%s713 + $0x18] sm:$0xf]
        %v721 = vld [vmem:[%s713 + $0x1c] sm:$0x3]
        %v724 = vunpack.c.l.b16 %v711
        %v725 = vunpack.c.l.b16 %v712
        %v726 = vpack.c.b16 %v725, %v724
        %v728 = vshrl.u32 %v726, 16
        %v730 = vshll.u32 %v726, 16
        %v732 = vrot.slane %v730, 1
        %v733 = vor.u32 %v728, %v732
        %v742 = vunpack.c.l.b16 %v714
        %v743 = vunpack.c.l.b16 %v715
        %v744 = vunpack.c.l.b16 %v716
        %v745 = vunpack.c.l.b16 %v717
        %v746 = vunpack.c.l.b16 %v718
        %v747 = vunpack.c.l.b16 %v719
        %v748 = vunpack.c.l.b16 %v720
        %v749 = vunpack.c.l.b16 %v721
        %v750 = vpack.c.b16 %v743, %v742
        %v751 = vpack.c.b16 %v745, %v744
        %v752 = vpack.c.b16 %v747, %v746
        %v753 = vpack.c.b16 %v749, %v748
        %v758 = vsel %vm582, %v733, 0
        %v761 = vsel %vm586, %v753, 0
        %763 = vmatpush.bf16.msra.mxu0 0
        %764 = vmatpush.bf16.msra.mxu0 0
        %765 = vmatpush.bf16.msra.mxu0 0
        %766 = vmatpush.bf16.msra.mxu0 0
        %767 = vmatpush.bf16.msra.mxu0 %v761
        %768 = vmatpush.bf16.msra.mxu0 %v752
        %769 = vmatpush.bf16.msra.mxu0 %v751
        %770 = vmatpush.bf16.msra.mxu0 %v750
        %771 = vmatmul.bf16.gmra.mxu0 %v758
        %v772 = vpop.f32.mrf.mxu0
        %v773 = vadd.f32 0.0, %v772
        %v774 = vpop.f32.mrf.mxu0
        %775 = vdwg.mxu0
        %v776 = vadd.f32 %v710, %v773
        %v777 = vld [vmem:[%s533] sm:$0xe]
        %s778 = scalar_lea.vmem %s2, 128
        %v779 = vld [vmem:[%s778] sm:$0xf]
        %v780 = vld [vmem:[%s778 + $0x4] sm:$0xf]
        %v781 = vld [vmem:[%s778 + $0x8] sm:$0xf]
        %v782 = vld [vmem:[%s778 + $0xc] sm:$0xf]
        %v783 = vld [vmem:[%s778 + $0x10] sm:$0xf]
        %v784 = vld [vmem:[%s778 + $0x14] sm:$0xf]
        %v785 = vld [vmem:[%s778 + $0x18] sm:$0xf]
        %v786 = vld [vmem:[%s778 + $0x1c] sm:$0x3]
        %v788 = vunpack.c.l.b16 %v777
        %v789 = vpack.c.b16 %v659, %v788
        %v790 = vrot.slane %v789, 1
        %v799 = vunpack.c.l.b16 %v779
        %v800 = vunpack.c.l.b16 %v780
        %v801 = vunpack.c.l.b16 %v781
        %v802 = vunpack.c.l.b16 %v782
        %v803 = vunpack.c.l.b16 %v783
        %v804 = vunpack.c.l.b16 %v784
        %v805 = vunpack.c.l.b16 %v785
        %v806 = vunpack.c.l.b16 %v786
        %v807 = vpack.c.b16 %v800, %v799
        %v808 = vpack.c.b16 %v802, %v801
        %v809 = vpack.c.b16 %v804, %v803
        %v810 = vpack.c.b16 %v806, %v805
        %v815 = vsel %vm582, %v790, 0
        %v818 = vsel %vm586, %v810, 0
        %820 = vmatpush.bf16.msra.mxu0 0
        %821 = vmatpush.bf16.msra.mxu0 0
        %822 = vmatpush.bf16.msra.mxu0 0
        %823 = vmatpush.bf16.msra.mxu0 0
        %824 = vmatpush.bf16.msra.mxu0 %v818
        %825 = vmatpush.bf16.msra.mxu0 %v809
        %826 = vmatpush.bf16.msra.mxu0 %v808
        %827 = vmatpush.bf16.msra.mxu0 %v807
        %828 = vmatmul.bf16.gmra.mxu0 %v815
        %v829 = vpop.f32.mrf.mxu0
        %v830 = vadd.f32 0.0, %v829
        %v831 = vpop.f32.mrf.mxu0
        %832 = vdwg.mxu0
        %v833 = vadd.f32 %v776, %v830
        %v834 = vld [vmem:[%s3] sm:$0x1]
        %v836 = vperm.slane %v834, 0
        %v838 = vadd.f32 %v833, %v836
        %v839 = vmul.f32 %v838, %v838
        %v840 = vld [vmem:[%s4] sm:$0xff]
        %v841 = vld [vmem:[%s4 + $0x8] sm:$0xff]
        %v842 = vld [vmem:[%s4 + $0x10] sm:$0xff]
        %v843 = vld [vmem:[%s4 + $0x18] sm:$0xff]
        %v844 = vld [vmem:[%s4 + $0x20] sm:$0xff]
        %v845 = vld [vmem:[%s4 + $0x28] sm:$0xff]
        %v846 = vld [vmem:[%s4 + $0x30] sm:$0xff]
        %v847 = vld [vmem:[%s4 + $0x38] sm:$0xff]
        %v848 = vld [vmem:[%s5] sm:$0x1]
        %v850 = vperm.slane %v848, 0
        %vm852 = vcmask 523264
        %v854 = vsel %vm852, %v839, 0
        %856 = vmatpush.msra.mxu0 0.0
        %857 = vmatpush.msra.mxu0 0.0
        %858 = vmatpush.msra.mxu0 0.0
        %859 = vmatpush.msra.mxu0 0.0
        %860 = vmatpush.msra.mxu0 0.0
        %861 = vmatpush.msra.mxu0 0.0
        %862 = vmatpush.msra.mxu0 0.0
        %863 = vmatpush.msra.mxu0 0.0
        %864 = vmatpush.msra.mxu0 %v847
        %865 = vmatpush.msra.mxu0 %v846
        %866 = vmatpush.msra.mxu0 %v845
        %867 = vmatpush.msra.mxu0 %v844
        %868 = vmatpush.msra.mxu0 %v843
        %869 = vmatpush.msra.mxu0 %v842
        %870 = vmatpush.msra.mxu0 %v841
        %871 = vmatpush.msra.mxu0 %v840
        %872 = vmatmul.f32.gmra.mxu0 %v854
        %v873 = vpop.f32.mrf.mxu0
        %v874 = vadd.f32 %v850, %v873
        %875 = vdwg.mxu0
        %v876 = vrsqrt.pop %v874
        %v877 = vmul.f32 %v876, %v874
        %v878 = vmul.f32 %v877, %v876
        %v879 = vmul.f32 0.5, %v878
        %v880 = vsub.f32 1.5, %v879
        %v881 = vmul.f32 %v876, %v880
        %vm882 = vweird.f32 %v874
        %vm883 = vweird.f32 %v876
        %vm884 = vmor %vm882, %vm883
        %v885 = vsel %vm884, %v876, %v881
        %v886 = vmul.f32 %v838, %v885
        %vm887 = vcmask 783360
        %888 = vst.msk [vmem:[#allocation2] sm:$0x3f] %vm887, 0.0
        %889 = vst.msk [vmem:[#allocation3] sm:$0x3f] %vm887, 0.0
        %891 = vrot.lane.b32.xlu0 %v886, 16
        %v892 = vpop.permute.xlu0 %891
        %vm894 = vcmask 647296
        %895 = vst.msk [vmem:[#allocation2 + $0x1] sm:$0x1] %vm894, %v892
        %vm896 = vcmask 648321
        %897 = vst.msk [vmem:[#allocation3] sm:$0x2] %vm896, %v892
        %vm898 = vcmask 649346
        %899 = vst.msk [vmem:[#allocation2] sm:$0x4] %vm898, %v892
        %vm900 = vcmask 650371
        %901 = vst.msk [vmem:[#allocation3 - $0x1] sm:$0x8] %vm900, %v892
        %vm902 = vcmask 651396
        %903 = vst.msk [vmem:[#allocation2 - $0x1] sm:$0x10] %vm902, %v892
        %vm904 = vcmask 652421
        %905 = vst.msk [vmem:[#allocation3 - $0x2] sm:$0x20] %vm904, %v892
        %vm906 = vcmask 653446
        %907 = vst.msk [vmem:[#allocation2 - $0x2] sm:$0x40] %vm906, %v892
        %vm908 = vcmask 654471
        %909 = vst.msk [vmem:[#allocation3 - $0x3] sm:$0x80] %vm908, %v892
        %v910 = vld [vmem:[#allocation2] sm:$0xf]
        %v911 = vpack.c.bf16 %v910, %v910
        %v912 = vld [vmem:[%s6] sm:$0xf]
        %v913 = vld [vmem:[%s6 + $0x4] sm:$0xf]
        %v914 = vld [vmem:[%s6 + $0x8] sm:$0xf]
        %v915 = vld [vmem:[%s6 + $0xc] sm:$0xf]
        %v916 = vld [vmem:[%s6 + $0x10] sm:$0xf]
        %v917 = vld [vmem:[%s6 + $0x14] sm:$0xf]
        %v918 = vld [vmem:[%s6 + $0x18] sm:$0xf]
        %v919 = vld [vmem:[%s6 + $0x1c] sm:$0xf]
        %v920 = vld [vmem:[%s6 + $0x20] sm:$0xf]
        %v921 = vld [vmem:[%s6 + $0x24] sm:$0xf]
        %v922 = vld [vmem:[%s6 + $0x28] sm:$0xf]
        %v923 = vld [vmem:[%s6 + $0x2c] sm:$0xf]
        %v924 = vld [vmem:[#allocation3] sm:$0xf]
        %v925 = vpack.c.bf16 %v924, %v924
        %s926 = scalar_lea.vmem %s6, 48
        %v927 = vld [vmem:[%s926] sm:$0xf]
        %v928 = vld [vmem:[%s926 + $0x4] sm:$0xf]
        %v929 = vld [vmem:[%s926 + $0x8] sm:$0xf]
        %v930 = vld [vmem:[%s926 + $0xc] sm:$0xf]
        %v931 = vld [vmem:[%s926 + $0x10] sm:$0xf]
        %v932 = vld [vmem:[%s926 + $0x14] sm:$0xf]
        %v933 = vld [vmem:[%s926 + $0x18] sm:$0xf]
        %v934 = vld [vmem:[%s926 + $0x1c] sm:$0xf]
        %v935 = vld [vmem:[%s926 + $0x20] sm:$0xf]
        %v936 = vld [vmem:[%s926 + $0x24] sm:$0xf]
        %v937 = vld [vmem:[%s926 + $0x28] sm:$0xf]
        %v938 = vld [vmem:[%s926 + $0x2c] sm:$0xf]
        %v951 = vunpack.c.l.b16 %v927
        %v952 = vunpack.c.l.b16 %v928
        %v953 = vunpack.c.l.b16 %v929
        %v954 = vunpack.c.l.b16 %v930
        %v955 = vunpack.c.l.b16 %v931
        %v956 = vunpack.c.l.b16 %v932
        %v957 = vunpack.c.l.b16 %v933
        %v958 = vunpack.c.l.b16 %v934
        %v959 = vunpack.c.l.b16 %v935
        %v960 = vunpack.c.l.b16 %v936
        %v961 = vunpack.c.l.b16 %v937
        %v962 = vunpack.c.l.b16 %v938
        %v963 = vpack.c.b16 %v952, %v951
        %v964 = vpack.c.b16 %v954, %v953
        %v965 = vpack.c.b16 %v956, %v955
        %v966 = vpack.c.b16 %v958, %v957
        %v967 = vpack.c.b16 %v960, %v959
        %v968 = vpack.c.b16 %v962, %v961
        %vm975 = vcmask 785408
        %v977 = vsel %vm975, %v925, 0
        %979 = vmatpush.bf16.msra.mxu0 0
        %980 = vmatpush.bf16.msra.mxu0 0
        %981 = vmatpush.bf16.msra.mxu0 %v968
        %982 = vmatpush.bf16.msra.mxu0 %v967
        %983 = vmatpush.bf16.msra.mxu0 %v966
        %984 = vmatpush.bf16.msra.mxu0 %v965
        %985 = vmatpush.bf16.msra.mxu0 %v964
        %986 = vmatpush.bf16.msra.mxu0 %v963
        %987 = vmatmul.bf16.gmra.mxu0 %v977
        %v988 = vpop.f32.mrf.mxu0
        %v989 = vadd.f32 0.0, %v988
        %v990 = vpop.f32.mrf.mxu0
        %991 = vdwg.mxu0
        %v1004 = vunpack.c.l.b16 %v912
        %v1005 = vunpack.c.l.b16 %v913
        %v1006 = vunpack.c.l.b16 %v914
        %v1007 = vunpack.c.l.b16 %v915
        %v1008 = vunpack.c.l.b16 %v916
        %v1009 = vunpack.c.l.b16 %v917
        %v1010 = vunpack.c.l.b16 %v918
        %v1011 = vunpack.c.l.b16 %v919
        %v1012 = vunpack.c.l.b16 %v920
        %v1013 = vunpack.c.l.b16 %v921
        %v1014 = vunpack.c.l.b16 %v922
        %v1015 = vunpack.c.l.b16 %v923
        %v1016 = vpack.c.b16 %v1005, %v1004
        %v1017 = vpack.c.b16 %v1007, %v1006
        %v1018 = vpack.c.b16 %v1009, %v1008
        %v1019 = vpack.c.b16 %v1011, %v1010
        %v1020 = vpack.c.b16 %v1013, %v1012
        %v1021 = vpack.c.b16 %v1015, %v1014
        %v1029 = vsel %vm975, %v911, 0
        %1031 = vmatpush.bf16.msra.mxu0 0
        %1032 = vmatpush.bf16.msra.mxu0 0
        %1033 = vmatpush.bf16.msra.mxu0 %v1021
        %1034 = vmatpush.bf16.msra.mxu0 %v1020
        %1035 = vmatpush.bf16.msra.mxu0 %v1019
        %1036 = vmatpush.bf16.msra.mxu0 %v1018
        %1037 = vmatpush.bf16.msra.mxu0 %v1017
        %1038 = vmatpush.bf16.msra.mxu0 %v1016
        %1039 = vmatmul.bf16.gmra.mxu0 %v1029
        %v1040 = vpop.f32.mrf.mxu0
        %v1041 = vadd.f32 %v989, %v1040
        %v1042 = vpop.f32.mrf.mxu0
        %1043 = vdwg.mxu0
        %v1044 = vld [vmem:[#allocation2 + $0x1] sm:$0xf]
        %v1045 = vpack.c.bf16 %v1044, %v1044
        %s1046 = scalar_lea.vmem %s6, 96
        %v1047 = vld [vmem:[%s1046] sm:$0xf]
        %v1048 = vld [vmem:[%s1046 + $0x4] sm:$0xf]
        %v1049 = vld [vmem:[%s1046 + $0x8] sm:$0xf]
        %v1050 = vld [vmem:[%s1046 + $0xc] sm:$0xf]
        %v1051 = vld [vmem:[%s1046 + $0x10] sm:$0xf]
        %v1052 = vld [vmem:[%s1046 + $0x14] sm:$0xf]
        %v1053 = vld [vmem:[%s1046 + $0x18] sm:$0xf]
        %v1054 = vld [vmem:[%s1046 + $0x1c] sm:$0xf]
        %v1055 = vld [vmem:[%s1046 + $0x20] sm:$0xf]
        %v1056 = vld [vmem:[%s1046 + $0x24] sm:$0xf]
        %v1057 = vld [vmem:[%s1046 + $0x28] sm:$0xf]
        %v1058 = vld [vmem:[%s1046 + $0x2c] sm:$0xf]
        %v1071 = vunpack.c.l.b16 %v1047
        %v1072 = vunpack.c.l.b16 %v1048
        %v1073 = vunpack.c.l.b16 %v1049
        %v1074 = vunpack.c.l.b16 %v1050
        %v1075 = vunpack.c.l.b16 %v1051
        %v1076 = vunpack.c.l.b16 %v1052
        %v1077 = vunpack.c.l.b16 %v1053
        %v1078 = vunpack.c.l.b16 %v1054
        %v1079 = vunpack.c.l.b16 %v1055
        %v1080 = vunpack.c.l.b16 %v1056
        %v1081 = vunpack.c.l.b16 %v1057
        %v1082 = vunpack.c.l.b16 %v1058
        %v1083 = vpack.c.b16 %v1072, %v1071
        %v1084 = vpack.c.b16 %v1074, %v1073
        %v1085 = vpack.c.b16 %v1076, %v1075
        %v1086 = vpack.c.b16 %v1078, %v1077
        %v1087 = vpack.c.b16 %v1080, %v1079
        %v1088 = vpack.c.b16 %v1082, %v1081
        %v1096 = vsel %vm975, %v1045, 0
        %1098 = vmatpush.bf16.msra.mxu0 0
        %1099 = vmatpush.bf16.msra.mxu0 0
        %1100 = vmatpush.bf16.msra.mxu0 %v1088
        %1101 = vmatpush.bf16.msra.mxu0 %v1087
        %1102 = vmatpush.bf16.msra.mxu0 %v1086
        %1103 = vmatpush.bf16.msra.mxu0 %v1085
        %1104 = vmatpush.bf16.msra.mxu0 %v1084
        %1105 = vmatpush.bf16.msra.mxu0 %v1083
        %1106 = vmatmul.bf16.gmra.mxu0 %v1096
        %v1107 = vpop.f32.mrf.mxu0
        %v1108 = vadd.f32 0.0, %v1107
        %v1109 = vpop.f32.mrf.mxu0
        %1110 = vdwg.mxu0
        %v1111 = vadd.f32 %v1041, %v1108
        %v1112 = vld [vmem:[#allocation3 + $0x1] sm:$0xf]
        %v1113 = vpack.c.bf16 %v1112, %v1112
        %s1114 = scalar_lea.vmem %s6, 144
        %v1115 = vld [vmem:[%s1114] sm:$0xf]
        %v1116 = vld [vmem:[%s1114 + $0x4] sm:$0xf]
        %v1117 = vld [vmem:[%s1114 + $0x8] sm:$0xf]
        %v1118 = vld [vmem:[%s1114 + $0xc] sm:$0xf]
        %v1119 = vld [vmem:[%s1114 + $0x10] sm:$0xf]
        %v1120 = vld [vmem:[%s1114 + $0x14] sm:$0xf]
        %v1121 = vld [vmem:[%s1114 + $0x18] sm:$0xf]
        %v1122 = vld [vmem:[%s1114 + $0x1c] sm:$0xf]
        %v1123 = vld [vmem:[%s1114 + $0x20] sm:$0xf]
        %v1124 = vld [vmem:[%s1114 + $0x24] sm:$0xf]
        %v1125 = vld [vmem:[%s1114 + $0x28] sm:$0xf]
        %v1126 = vld [vmem:[%s1114 + $0x2c] sm:$0xf]
        %v1139 = vunpack.c.l.b16 %v1115
        %v1140 = vunpack.c.l.b16 %v1116
        %v1141 = vunpack.c.l.b16 %v1117
        %v1142 = vunpack.c.l.b16 %v1118
        %v1143 = vunpack.c.l.b16 %v1119
        %v1144 = vunpack.c.l.b16 %v1120
        %v1145 = vunpack.c.l.b16 %v1121
        %v1146 = vunpack.c.l.b16 %v1122
        %v1147 = vunpack.c.l.b16 %v1123
        %v1148 = vunpack.c.l.b16 %v1124
        %v1149 = vunpack.c.l.b16 %v1125
        %v1150 = vunpack.c.l.b16 %v1126
        %v1151 = vpack.c.b16 %v1140, %v1139
        %v1152 = vpack.c.b16 %v1142, %v1141
        %v1153 = vpack.c.b16 %v1144, %v1143
        %v1154 = vpack.c.b16 %v1146, %v1145
        %v1155 = vpack.c.b16 %v1148, %v1147
        %v1156 = vpack.c.b16 %v1150, %v1149
        %v1164 = vsel %vm975, %v1113, 0
        %1166 = vmatpush.bf16.msra.mxu0 0
        %1167 = vmatpush.bf16.msra.mxu0 0
        %1168 = vmatpush.bf16.msra.mxu0 %v1156
        %1169 = vmatpush.bf16.msra.mxu0 %v1155
        %1170 = vmatpush.bf16.msra.mxu0 %v1154
        %1171 = vmatpush.bf16.msra.mxu0 %v1153
        %1172 = vmatpush.bf16.msra.mxu0 %v1152
        %1173 = vmatpush.bf16.msra.mxu0 %v1151
        %1174 = vmatmul.bf16.gmra.mxu0 %v1164
        %v1175 = vpop.f32.mrf.mxu0
        %v1176 = vadd.f32 0.0, %v1175
        %v1177 = vpop.f32.mrf.mxu0
        %1178 = vdwg.mxu0
        %v1179 = vadd.f32 %v1111, %v1176
        %v1180 = vld [vmem:[#allocation2 + $0x2] sm:$0xf]
        %v1181 = vpack.c.bf16 %v1180, %v1180
        %s1182 = scalar_lea.vmem %s6, 192
        %v1183 = vld [vmem:[%s1182] sm:$0xf]
        %v1184 = vld [vmem:[%s1182 + $0x4] sm:$0xf]
        %v1185 = vld [vmem:[%s1182 + $0x8] sm:$0xf]
        %v1186 = vld [vmem:[%s1182 + $0xc] sm:$0xf]
        %v1187 = vld [vmem:[%s1182 + $0x10] sm:$0xf]
        %v1188 = vld [vmem:[%s1182 + $0x14] sm:$0xf]
        %v1189 = vld [vmem:[%s1182 + $0x18] sm:$0xf]
        %v1190 = vld [vmem:[%s1182 + $0x1c] sm:$0xf]
        %v1191 = vld [vmem:[%s1182 + $0x20] sm:$0xf]
        %v1192 = vld [vmem:[%s1182 + $0x24] sm:$0xf]
        %v1193 = vld [vmem:[%s1182 + $0x28] sm:$0xf]
        %v1194 = vld [vmem:[%s1182 + $0x2c] sm:$0xf]
        %v1207 = vunpack.c.l.b16 %v1183
        %v1208 = vunpack.c.l.b16 %v1184
        %v1209 = vunpack.c.l.b16 %v1185
        %v1210 = vunpack.c.l.b16 %v1186
        %v1211 = vunpack.c.l.b16 %v1187
        %v1212 = vunpack.c.l.b16 %v1188
        %v1213 = vunpack.c.l.b16 %v1189
        %v1214 = vunpack.c.l.b16 %v1190
        %v1215 = vunpack.c.l.b16 %v1191
        %v1216 = vunpack.c.l.b16 %v1192
        %v1217 = vunpack.c.l.b16 %v1193
        %v1218 = vunpack.c.l.b16 %v1194
        %v1219 = vpack.c.b16 %v1208, %v1207
        %v1220 = vpack.c.b16 %v1210, %v1209
        %v1221 = vpack.c.b16 %v1212, %v1211
        %v1222 = vpack.c.b16 %v1214, %v1213
        %v1223 = vpack.c.b16 %v1216, %v1215
        %v1224 = vpack.c.b16 %v1218, %v1217
        %v1232 = vsel %vm975, %v1181, 0
        %1234 = vmatpush.bf16.msra.mxu0 0
        %1235 = vmatpush.bf16.msra.mxu0 0
        %1236 = vmatpush.bf16.msra.mxu0 %v1224
        %1237 = vmatpush.bf16.msra.mxu0 %v1223
        %1238 = vmatpush.bf16.msra.mxu0 %v1222
        %1239 = vmatpush.bf16.msra.mxu0 %v1221
        %1240 = vmatpush.bf16.msra.mxu0 %v1220
        %1241 = vmatpush.bf16.msra.mxu0 %v1219
        %1242 = vmatmul.bf16.gmra.mxu0 %v1232
        %v1243 = vpop.f32.mrf.mxu0
        %v1244 = vadd.f32 0.0, %v1243
        %v1245 = vpop.f32.mrf.mxu0
        %1246 = vdwg.mxu0
        %v1247 = vadd.f32 %v1179, %v1244
        %v1248 = vld [vmem:[%s7] sm:$0x1]
        %v1250 = vperm.slane %v1248, 0
        %v1252 = vadd.f32 %v1247, %v1250
        %v1253 = vmul.f32 %v1252, %v1252
        %v1254 = vld [vmem:[%s8] sm:$0xff]
        %v1255 = vld [vmem:[%s8 + $0x8] sm:$0xff]
        %v1256 = vld [vmem:[%s8 + $0x10] sm:$0xff]
        %v1257 = vld [vmem:[%s8 + $0x18] sm:$0xff]
        %v1258 = vld [vmem:[%s9] sm:$0x1]
        %v1260 = vperm.slane %v1258, 0
        %vm1262 = vcmask 261120
        %v1264 = vsel %vm1262, %v1253, 0
        %1266 = vmatpush.msra.mxu0 0.0
        %1267 = vmatpush.msra.mxu0 0.0
        %1268 = vmatpush.msra.mxu0 0.0
        %1269 = vmatpush.msra.mxu0 0.0
        %1270 = vmatpush.msra.mxu0 0.0
        %1271 = vmatpush.msra.mxu0 0.0
        %1272 = vmatpush.msra.mxu0 0.0
        %1273 = vmatpush.msra.mxu0 0.0
        %1274 = vmatpush.msra.mxu0 0.0
        %1275 = vmatpush.msra.mxu0 0.0
        %1276 = vmatpush.msra.mxu0 0.0
        %1277 = vmatpush.msra.mxu0 0.0
        %1278 = vmatpush.msra.mxu0 %v1257
        %1279 = vmatpush.msra.mxu0 %v1256
        %1280 = vmatpush.msra.mxu0 %v1255
        %1281 = vmatpush.msra.mxu0 %v1254
        %1282 = vmatmul.f32.gmra.mxu0 %v1264
        %v1283 = vpop.f32.mrf.mxu0
        %v1284 = vadd.f32 %v1260, %v1283
        %1285 = vdwg.mxu0
        %v1286 = vrsqrt.pop %v1284
        %v1287 = vmul.f32 %v1286, %v1284
        %v1288 = vmul.f32 %v1287, %v1286
        %v1289 = vmul.f32 0.5, %v1288
        %v1290 = vsub.f32 1.5, %v1289
        %v1291 = vmul.f32 %v1286, %v1290
        %vm1292 = vweird.f32 %v1284
        %vm1293 = vweird.f32 %v1286
        %vm1294 = vmor %vm1292, %vm1293
        %v1295 = vsel %vm1294, %v1286, %v1291
        %v1296 = vmul.f32 %v1252, %v1295
        %vm1297 = vcmask 519168
        %1298 = vst.msk [vmem:[#allocation4] sm:$0xf] %vm1297, 0.0
        %1299 = vst.msk [vmem:[#allocation5] sm:$0xf] %vm1297, 0.0
        %1301 = vrot.lane.b32.xlu0 %v1296, 16
        %v1302 = vpop.permute.xlu0 %1301
        %vm1304 = vcmask 385152
        %1305 = vst.msk [vmem:[#allocation4 + $0x1] sm:$0x1] %vm1304, %v1302
        %vm1306 = vcmask 386177
        %1307 = vst.msk [vmem:[#allocation5] sm:$0x2] %vm1306, %v1302
        %vm1308 = vcmask 387202
        %1309 = vst.msk [vmem:[#allocation4] sm:$0x4] %vm1308, %v1302
        %vm1310 = vcmask 388227
        %1311 = vst.msk [vmem:[#allocation5 - $0x1] sm:$0x8] %vm1310, %v1302
        %v1312 = vld [vmem:[#allocation4] sm:$0x3]
        %v1313 = vpack.c.bf16 %v1312, %v1312
        %v1314 = vld [vmem:[%s10] sm:$0xf]
        %v1315 = vld [vmem:[%s10 + $0x4] sm:$0xf]
        %v1316 = vld [vmem:[%s10 + $0x8] sm:$0xf]
        %v1317 = vld [vmem:[%s10 + $0xc] sm:$0xf]
        %v1318 = vld [vmem:[%s10 + $0x10] sm:$0xf]
        %v1319 = vld [vmem:[%s10 + $0x14] sm:$0xf]
        %v1320 = vld [vmem:[%s10 + $0x18] sm:$0xf]
        %v1321 = vld [vmem:[%s10 + $0x1c] sm:$0xf]
        %v1322 = vld [vmem:[#allocation5] sm:$0x3]
        %v1323 = vpack.c.bf16 %v1322, %v1322
        %s1324 = scalar_lea.vmem %s10, 32
        %v1325 = vld [vmem:[%s1324] sm:$0xf]
        %v1326 = vld [vmem:[%s1324 + $0x4] sm:$0xf]
        %v1327 = vld [vmem:[%s1324 + $0x8] sm:$0xf]
        %v1328 = vld [vmem:[%s1324 + $0xc] sm:$0xf]
        %v1329 = vld [vmem:[%s1324 + $0x10] sm:$0xf]
        %v1330 = vld [vmem:[%s1324 + $0x14] sm:$0xf]
        %v1331 = vld [vmem:[%s1324 + $0x18] sm:$0xf]
        %v1332 = vld [vmem:[%s1324 + $0x1c] sm:$0xf]
        %v1341 = vunpack.c.l.b16 %v1325
        %v1342 = vunpack.c.l.b16 %v1326
        %v1343 = vunpack.c.l.b16 %v1327
        %v1344 = vunpack.c.l.b16 %v1328
        %v1345 = vunpack.c.l.b16 %v1329
        %v1346 = vunpack.c.l.b16 %v1330
        %v1347 = vunpack.c.l.b16 %v1331
        %v1348 = vunpack.c.l.b16 %v1332
        %v1349 = vpack.c.b16 %v1342, %v1341
        %v1350 = vpack.c.b16 %v1344, %v1343
        %v1351 = vpack.c.b16 %v1346, %v1345
        %v1352 = vpack.c.b16 %v1348, %v1347
        %v1358 = vsel %vm852, %v1323, 0
        %1360 = vmatpush.bf16.msra.mxu0 0
        %1361 = vmatpush.bf16.msra.mxu0 0
        %1362 = vmatpush.bf16.msra.mxu0 0
        %1363 = vmatpush.bf16.msra.mxu0 0
        %1364 = vmatpush.bf16.msra.mxu0 %v1352
        %1365 = vmatpush.bf16.msra.mxu0 %v1351
        %1366 = vmatpush.bf16.msra.mxu0 %v1350
        %1367 = vmatpush.bf16.msra.mxu0 %v1349
        %1368 = vmatmul.bf16.gmra.mxu0 %v1358
        %v1369 = vpop.f32.mrf.mxu0
        %v1370 = vadd.f32 0.0, %v1369
        %v1371 = vpop.f32.mrf.mxu0
        %1372 = vdwg.mxu0
        %v1381 = vunpack.c.l.b16 %v1314
        %v1382 = vunpack.c.l.b16 %v1315
        %v1383 = vunpack.c.l.b16 %v1316
        %v1384 = vunpack.c.l.b16 %v1317
        %v1385 = vunpack.c.l.b16 %v1318
        %v1386 = vunpack.c.l.b16 %v1319
        %v1387 = vunpack.c.l.b16 %v1320
        %v1388 = vunpack.c.l.b16 %v1321
        %v1389 = vpack.c.b16 %v1382, %v1381
        %v1390 = vpack.c.b16 %v1384, %v1383
        %v1391 = vpack.c.b16 %v1386, %v1385
        %v1392 = vpack.c.b16 %v1388, %v1387
        %v1398 = vsel %vm852, %v1313, 0
        %1400 = vmatpush.bf16.msra.mxu0 0
        %1401 = vmatpush.bf16.msra.mxu0 0
        %1402 = vmatpush.bf16.msra.mxu0 0
        %1403 = vmatpush.bf16.msra.mxu0 0
        %1404 = vmatpush.bf16.msra.mxu0 %v1392
        %1405 = vmatpush.bf16.msra.mxu0 %v1391
        %1406 = vmatpush.bf16.msra.mxu0 %v1390
        %1407 = vmatpush.bf16.msra.mxu0 %v1389
        %1408 = vmatmul.bf16.gmra.mxu0 %v1398
        %v1409 = vpop.f32.mrf.mxu0
        %v1410 = vadd.f32 %v1370, %v1409
        %v1411 = vpop.f32.mrf.mxu0
        %1412 = vdwg.mxu0
        %v1413 = vld [vmem:[#allocation4 + $0x1] sm:$0x3]
        %v1414 = vpack.c.bf16 %v1413, %v1413
        %s1415 = scalar_lea.vmem %s10, 64
        %v1416 = vld [vmem:[%s1415] sm:$0xf]
        %v1417 = vld [vmem:[%s1415 + $0x4] sm:$0xf]
        %v1418 = vld [vmem:[%s1415 + $0x8] sm:$0xf]
        %v1419 = vld [vmem:[%s1415 + $0xc] sm:$0xf]
        %v1420 = vld [vmem:[%s1415 + $0x10] sm:$0xf]
        %v1421 = vld [vmem:[%s1415 + $0x14] sm:$0xf]
        %v1422 = vld [vmem:[%s1415 + $0x18] sm:$0xf]
        %v1423 = vld [vmem:[%s1415 + $0x1c] sm:$0xf]
        %v1432 = vunpack.c.l.b16 %v1416
        %v1433 = vunpack.c.l.b16 %v1417
        %v1434 = vunpack.c.l.b16 %v1418
        %v1435 = vunpack.c.l.b16 %v1419
        %v1436 = vunpack.c.l.b16 %v1420
        %v1437 = vunpack.c.l.b16 %v1421
        %v1438 = vunpack.c.l.b16 %v1422
        %v1439 = vunpack.c.l.b16 %v1423
        %v1440 = vpack.c.b16 %v1433, %v1432
        %v1441 = vpack.c.b16 %v1435, %v1434
        %v1442 = vpack.c.b16 %v1437, %v1436
        %v1443 = vpack.c.b16 %v1439, %v1438
        %v1449 = vsel %vm852, %v1414, 0
        %1451 = vmatpush.bf16.msra.mxu0 0
        %1452 = vmatpush.bf16.msra.mxu0 0
        %1453 = vmatpush.bf16.msra.mxu0 0
        %1454 = vmatpush.bf16.msra.mxu0 0
        %1455 = vmatpush.bf16.msra.mxu0 %v1443
        %1456 = vmatpush.bf16.msra.mxu0 %v1442
        %1457 = vmatpush.bf16.msra.mxu0 %v1441
        %1458 = vmatpush.bf16.msra.mxu0 %v1440
        %1459 = vmatmul.bf16.gmra.mxu0 %v1449
        %v1460 = vpop.f32.mrf.mxu0
        %v1461 = vadd.f32 0.0, %v1460
        %v1462 = vpop.f32.mrf.mxu0
        %1463 = vdwg.mxu0
        %v1464 = vadd.f32 %v1410, %v1461
        %v1465 = vld [vmem:[#allocation5 + $0x1] sm:$0x3]
        %v1466 = vpack.c.bf16 %v1465, %v1465
        %s1467 = scalar_lea.vmem %s10, 96
        %v1468 = vld [vmem:[%s1467] sm:$0xf]
        %v1469 = vld [vmem:[%s1467 + $0x4] sm:$0xf]
        %v1470 = vld [vmem:[%s1467 + $0x8] sm:$0xf]
        %v1471 = vld [vmem:[%s1467 + $0xc] sm:$0xf]
        %v1472 = vld [vmem:[%s1467 + $0x10] sm:$0xf]
        %v1473 = vld [vmem:[%s1467 + $0x14] sm:$0xf]
        %v1474 = vld [vmem:[%s1467 + $0x18] sm:$0xf]
        %v1475 = vld [vmem:[%s1467 + $0x1c] sm:$0xf]
        %v1484 = vunpack.c.l.b16 %v1468
        %v1485 = vunpack.c.l.b16 %v1469
        %v1486 = vunpack.c.l.b16 %v1470
        %v1487 = vunpack.c.l.b16 %v1471
        %v1488 = vunpack.c.l.b16 %v1472
        %v1489 = vunpack.c.l.b16 %v1473
        %v1490 = vunpack.c.l.b16 %v1474
        %v1491 = vunpack.c.l.b16 %v1475
        %v1492 = vpack.c.b16 %v1485, %v1484
        %v1493 = vpack.c.b16 %v1487, %v1486
        %v1494 = vpack.c.b16 %v1489, %v1488
        %v1495 = vpack.c.b16 %v1491, %v1490
        %v1501 = vsel %vm852, %v1466, 0
        %1503 = vmatpush.bf16.msra.mxu0 0
        %1504 = vmatpush.bf16.msra.mxu0 0
        %1505 = vmatpush.bf16.msra.mxu0 0
        %1506 = vmatpush.bf16.msra.mxu0 0
        %1507 = vmatpush.bf16.msra.mxu0 %v1495
        %1508 = vmatpush.bf16.msra.mxu0 %v1494
        %1509 = vmatpush.bf16.msra.mxu0 %v1493
        %1510 = vmatpush.bf16.msra.mxu0 %v1492
        %1511 = vmatmul.bf16.gmra.mxu0 %v1501
        %v1512 = vpop.f32.mrf.mxu0
        %v1513 = vadd.f32 0.0, %v1512
        %v1514 = vpop.f32.mrf.mxu0
        %1515 = vdwg.mxu0
        %v1516 = vadd.f32 %v1464, %v1513
        %v1517 = vld [vmem:[#allocation4 + $0x2] sm:$0x3]
        %v1518 = vpack.c.bf16 %v1517, %v1517
        %s1519 = scalar_lea.vmem %s10, 128
        %v1520 = vld [vmem:[%s1519] sm:$0xf]
        %v1521 = vld [vmem:[%s1519 + $0x4] sm:$0xf]
        %v1522 = vld [vmem:[%s1519 + $0x8] sm:$0xf]
        %v1523 = vld [vmem:[%s1519 + $0xc] sm:$0xf]
        %v1524 = vld [vmem:[%s1519 + $0x10] sm:$0xf]
        %v1525 = vld [vmem:[%s1519 + $0x14] sm:$0xf]
        %v1526 = vld [vmem:[%s1519 + $0x18] sm:$0xf]
        %v1527 = vld [vmem:[%s1519 + $0x1c] sm:$0xf]
        %v1536 = vunpack.c.l.b16 %v1520
        %v1537 = vunpack.c.l.b16 %v1521
        %v1538 = vunpack.c.l.b16 %v1522
        %v1539 = vunpack.c.l.b16 %v1523
        %v1540 = vunpack.c.l.b16 %v1524
        %v1541 = vunpack.c.l.b16 %v1525
        %v1542 = vunpack.c.l.b16 %v1526
        %v1543 = vunpack.c.l.b16 %v1527
        %v1544 = vpack.c.b16 %v1537, %v1536
        %v1545 = vpack.c.b16 %v1539, %v1538
        %v1546 = vpack.c.b16 %v1541, %v1540
        %v1547 = vpack.c.b16 %v1543, %v1542
        %v1553 = vsel %vm852, %v1518, 0
        %1555 = vmatpush.bf16.msra.mxu0 0
        %1556 = vmatpush.bf16.msra.mxu0 0
        %1557 = vmatpush.bf16.msra.mxu0 0
        %1558 = vmatpush.bf16.msra.mxu0 0
        %1559 = vmatpush.bf16.msra.mxu0 %v1547
        %1560 = vmatpush.bf16.msra.mxu0 %v1546
        %1561 = vmatpush.bf16.msra.mxu0 %v1545
        %1562 = vmatpush.bf16.msra.mxu0 %v1544
        %1563 = vmatmul.bf16.gmra.mxu0 %v1553
        %v1564 = vpop.f32.mrf.mxu0
        %v1565 = vadd.f32 0.0, %v1564
        %v1566 = vpop.f32.mrf.mxu0
        %1567 = vdwg.mxu0
        %v1568 = vadd.f32 %v1516, %v1565
        %v1569 = vld [vmem:[%s11] sm:$0x1]
        %v1571 = vperm.slane %v1569, 0
        %v1573 = vadd.f32 %v1568, %v1571
        %v1574 = vmul.f32 %v1573, %v1573
        %v1575 = vld [vmem:[%s12] sm:$0xff]
        %v1576 = vld [vmem:[%s12 + $0x8] sm:$0xff]
        %v1577 = vld [vmem:[%s13] sm:$0x1]
        %v1579 = vperm.slane %v1577, 0
        %vm1581 = vcmask 130048
        %v1583 = vsel %vm1581, %v1574, 0
        %1585 = vmatpush.msra.mxu0 0.0
        %1586 = vmatpush.msra.mxu0 0.0
        %1587 = vmatpush.msra.mxu0 0.0
        %1588 = vmatpush.msra.mxu0 0.0
        %1589 = vmatpush.msra.mxu0 0.0
        %1590 = vmatpush.msra.mxu0 0.0
        %1591 = vmatpush.msra.mxu0 0.0
        %1592 = vmatpush.msra.mxu0 0.0
        %1593 = vmatpush.msra.mxu0 0.0
        %1594 = vmatpush.msra.mxu0 0.0
        %1595 = vmatpush.msra.mxu0 0.0
        %1596 = vmatpush.msra.mxu0 0.0
        %1597 = vmatpush.msra.mxu0 0.0
        %1598 = vmatpush.msra.mxu0 0.0
        %1599 = vmatpush.msra.mxu0 %v1576
        %1600 = vmatpush.msra.mxu0 %v1575
        %1601 = vmatmul.f32.gmra.mxu0 %v1583
        %v1602 = vpop.f32.mrf.mxu0
        %v1603 = vadd.f32 %v1579, %v1602
        %1604 = vdwg.mxu0
        %v1605 = vrsqrt.pop %v1603
        %v1606 = vmul.f32 %v1605, %v1603
        %v1607 = vmul.f32 %v1606, %v1605
        %v1608 = vmul.f32 0.5, %v1607
        %v1609 = vsub.f32 1.5, %v1608
        %v1610 = vmul.f32 %v1605, %v1609
        %vm1611 = vweird.f32 %v1603
        %vm1612 = vweird.f32 %v1605
        %vm1613 = vmor %vm1611, %vm1612
        %v1614 = vsel %vm1613, %v1605, %v1610
        %v1615 = vmul.f32 %v1573, %v1614
        %vm1616 = vcmask 387072
        %1617 = vst.msk [vmem:[#allocation6] sm:$0x7] %vm1616, 0.0
        %1618 = vst.msk [vmem:[#allocation7] sm:$0x7] %vm1616, 0.0
        %1620 = vrot.lane.b32.xlu0 %v1615, 16
        %v1621 = vpop.permute.xlu0 %1620
        %vm1623 = vcmask 254080
        %1624 = vst.msk [vmem:[#allocation6 + $0x1] sm:$0x1] %vm1623, %v1621
        %vm1625 = vcmask 255105
        %1626 = vst.msk [vmem:[#allocation7] sm:$0x2] %vm1625, %v1621
        %v1627 = vld [vmem:[#allocation6] sm:$0x1]
        %v1628 = vpack.c.bf16 %v1627, %v1627
        %v1629 = vld [vmem:[%s14] sm:$0xf]
        %v1630 = vld [vmem:[%s14 + $0x4] sm:$0xf]
        %v1631 = vld [vmem:[%s14 + $0x8] sm:$0xf]
        %v1632 = vld [vmem:[%s14 + $0xc] sm:$0xf]
        %v1633 = vld [vmem:[%s14 + $0x10] sm:$0xf]
        %v1634 = vld [vmem:[%s14 + $0x14] sm:$0xf]
        %v1635 = vld [vmem:[#allocation7] sm:$0x1]
        %v1636 = vpack.c.bf16 %v1635, %v1635
        %s1637 = scalar_lea.vmem %s14, 24
        %v1638 = vld [vmem:[%s1637] sm:$0xf]
        %v1639 = vld [vmem:[%s1637 + $0x4] sm:$0xf]
        %v1640 = vld [vmem:[%s1637 + $0x8] sm:$0xf]
        %v1641 = vld [vmem:[%s1637 + $0xc] sm:$0xf]
        %v1642 = vld [vmem:[%s1637 + $0x10] sm:$0xf]
        %v1643 = vld [vmem:[%s1637 + $0x14] sm:$0xf]
        %v1650 = vunpack.c.l.b16 %v1638
        %v1651 = vunpack.c.l.b16 %v1639
        %v1652 = vunpack.c.l.b16 %v1640
        %v1653 = vunpack.c.l.b16 %v1641
        %v1654 = vunpack.c.l.b16 %v1642
        %v1655 = vunpack.c.l.b16 %v1643
        %v1656 = vpack.c.b16 %v1651, %v1650
        %v1657 = vpack.c.b16 %v1653, %v1652
        %v1658 = vpack.c.b16 %v1655, %v1654
        %vm1662 = vcmask 392192
        %v1664 = vsel %vm1662, %v1636, 0
        %1666 = vmatpush.bf16.msra.mxu0 0
        %1667 = vmatpush.bf16.msra.mxu0 0
        %1668 = vmatpush.bf16.msra.mxu0 0
        %1669 = vmatpush.bf16.msra.mxu0 0
        %1670 = vmatpush.bf16.msra.mxu0 0
        %1671 = vmatpush.bf16.msra.mxu0 %v1658
        %1672 = vmatpush.bf16.msra.mxu0 %v1657
        %1673 = vmatpush.bf16.msra.mxu0 %v1656
        %1674 = vmatmul.bf16.gmra.mxu0 %v1664
        %v1675 = vpop.f32.mrf.mxu0
        %v1676 = vadd.f32 0.0, %v1675
        %v1677 = vpop.f32.mrf.mxu0
        %1678 = vdwg.mxu0
        %v1685 = vunpack.c.l.b16 %v1629
        %v1686 = vunpack.c.l.b16 %v1630
        %v1687 = vunpack.c.l.b16 %v1631
        %v1688 = vunpack.c.l.b16 %v1632
        %v1689 = vunpack.c.l.b16 %v1633
        %v1690 = vunpack.c.l.b16 %v1634
        %v1691 = vpack.c.b16 %v1686, %v1685
        %v1692 = vpack.c.b16 %v1688, %v1687
        %v1693 = vpack.c.b16 %v1690, %v1689
        %v1698 = vsel %vm1662, %v1628, 0
        %1700 = vmatpush.bf16.msra.mxu0 0
        %1701 = vmatpush.bf16.msra.mxu0 0
        %1702 = vmatpush.bf16.msra.mxu0 0
        %1703 = vmatpush.bf16.msra.mxu0 0
        %1704 = vmatpush.bf16.msra.mxu0 0
        %1705 = vmatpush.bf16.msra.mxu0 %v1693
        %1706 = vmatpush.bf16.msra.mxu0 %v1692
        %1707 = vmatpush.bf16.msra.mxu0 %v1691
        %1708 = vmatmul.bf16.gmra.mxu0 %v1698
        %v1709 = vpop.f32.mrf.mxu0
        %v1710 = vadd.f32 %v1676, %v1709
        %v1711 = vpop.f32.mrf.mxu0
        %1712 = vdwg.mxu0
        %v1713 = vld [vmem:[#allocation6 + $0x1] sm:$0x1]
        %v1714 = vpack.c.bf16 %v1713, %v1713
        %s1715 = scalar_lea.vmem %s14, 48
        %v1716 = vld [vmem:[%s1715] sm:$0xf]
        %v1717 = vld [vmem:[%s1715 + $0x4] sm:$0xf]
        %v1718 = vld [vmem:[%s1715 + $0x8] sm:$0xf]
        %v1719 = vld [vmem:[%s1715 + $0xc] sm:$0xf]
        %v1720 = vld [vmem:[%s1715 + $0x10] sm:$0xf]
        %v1721 = vld [vmem:[%s1715 + $0x14] sm:$0xf]
        %v1728 = vunpack.c.l.b16 %v1716
        %v1729 = vunpack.c.l.b16 %v1717
        %v1730 = vunpack.c.l.b16 %v1718
        %v1731 = vunpack.c.l.b16 %v1719
        %v1732 = vunpack.c.l.b16 %v1720
        %v1733 = vunpack.c.l.b16 %v1721
        %v1734 = vpack.c.b16 %v1729, %v1728
        %v1735 = vpack.c.b16 %v1731, %v1730
        %v1736 = vpack.c.b16 %v1733, %v1732
        %v1741 = vsel %vm1662, %v1714, 0
        %1743 = vmatpush.bf16.msra.mxu0 0
        %1744 = vmatpush.bf16.msra.mxu0 0
        %1745 = vmatpush.bf16.msra.mxu0 0
        %1746 = vmatpush.bf16.msra.mxu0 0
        %1747 = vmatpush.bf16.msra.mxu0 0
        %1748 = vmatpush.bf16.msra.mxu0 %v1736
        %1749 = vmatpush.bf16.msra.mxu0 %v1735
        %1750 = vmatpush.bf16.msra.mxu0 %v1734
        %1751 = vmatmul.bf16.gmra.mxu0 %v1741
        %v1752 = vpop.f32.mrf.mxu0
        %v1753 = vadd.f32 0.0, %v1752
        %v1754 = vpop.f32.mrf.mxu0
        %1755 = vdwg.mxu0
        %v1756 = vadd.f32 %v1710, %v1753
        %v1757 = vld [vmem:[#allocation7 + $0x1] sm:$0x1]
        %v1758 = vpack.c.bf16 %v1757, %v1757
        %s1759 = scalar_lea.vmem %s14, 72
        %v1760 = vld [vmem:[%s1759] sm:$0xf]
        %v1761 = vld [vmem:[%s1759 + $0x4] sm:$0xf]
        %v1762 = vld [vmem:[%s1759 + $0x8] sm:$0xf]
        %v1763 = vld [vmem:[%s1759 + $0xc] sm:$0xf]
        %v1764 = vld [vmem:[%s1759 + $0x10] sm:$0xf]
        %v1765 = vld [vmem:[%s1759 + $0x14] sm:$0xf]
        %v1772 = vunpack.c.l.b16 %v1760
        %v1773 = vunpack.c.l.b16 %v1761
        %v1774 = vunpack.c.l.b16 %v1762
        %v1775 = vunpack.c.l.b16 %v1763
        %v1776 = vunpack.c.l.b16 %v1764
        %v1777 = vunpack.c.l.b16 %v1765
        %v1778 = vpack.c.b16 %v1773, %v1772
        %v1779 = vpack.c.b16 %v1775, %v1774
        %v1780 = vpack.c.b16 %v1777, %v1776
        %v1785 = vsel %vm1662, %v1758, 0
        %1787 = vmatpush.bf16.msra.mxu0 0
        %1788 = vmatpush.bf16.msra.mxu0 0
        %1789 = vmatpush.bf16.msra.mxu0 0
        %1790 = vmatpush.bf16.msra.mxu0 0
        %1791 = vmatpush.bf16.msra.mxu0 0
        %1792 = vmatpush.bf16.msra.mxu0 %v1780
        %1793 = vmatpush.bf16.msra.mxu0 %v1779
        %1794 = vmatpush.bf16.msra.mxu0 %v1778
        %1795 = vmatmul.bf16.gmra.mxu0 %v1785
        %v1796 = vpop.f32.mrf.mxu0
        %v1797 = vadd.f32 0.0, %v1796
        %v1798 = vpop.f32.mrf.mxu0
        %1799 = vdwg.mxu0
        %v1800 = vadd.f32 %v1756, %v1797
        %v1801 = vld [vmem:[#allocation6 + $0x2] sm:$0x1]
        %v1802 = vpack.c.bf16 %v1801, %v1801
        %s1803 = scalar_lea.vmem %s14, 96
        %v1804 = vld [vmem:[%s1803] sm:$0xf]
        %v1805 = vld [vmem:[%s1803 + $0x4] sm:$0xf]
        %v1806 = vld [vmem:[%s1803 + $0x8] sm:$0xf]
        %v1807 = vld [vmem:[%s1803 + $0xc] sm:$0xf]
        %v1808 = vld [vmem:[%s1803 + $0x10] sm:$0xf]
        %v1809 = vld [vmem:[%s1803 + $0x14] sm:$0xf]
        %v1816 = vunpack.c.l.b16 %v1804
        %v1817 = vunpack.c.l.b16 %v1805
        %v1818 = vunpack.c.l.b16 %v1806
        %v1819 = vunpack.c.l.b16 %v1807
        %v1820 = vunpack.c.l.b16 %v1808
        %v1821 = vunpack.c.l.b16 %v1809
        %v1822 = vpack.c.b16 %v1817, %v1816
        %v1823 = vpack.c.b16 %v1819, %v1818
        %v1824 = vpack.c.b16 %v1821, %v1820
        %v1829 = vsel %vm1662, %v1802, 0
        %1831 = vmatpush.bf16.msra.mxu0 0
        %1832 = vmatpush.bf16.msra.mxu0 0
        %1833 = vmatpush.bf16.msra.mxu0 0
        %1834 = vmatpush.bf16.msra.mxu0 0
        %1835 = vmatpush.bf16.msra.mxu0 0
        %1836 = vmatpush.bf16.msra.mxu0 %v1824
        %1837 = vmatpush.bf16.msra.mxu0 %v1823
        %1838 = vmatpush.bf16.msra.mxu0 %v1822
        %1839 = vmatmul.bf16.gmra.mxu0 %v1829
        %v1840 = vpop.f32.mrf.mxu0
        %v1841 = vadd.f32 0.0, %v1840
        %v1842 = vpop.f32.mrf.mxu0
        %1843 = vdwg.mxu0
        %v1844 = vadd.f32 %v1800, %v1841
        %v1845 = vld [vmem:[%s15] sm:$0x1]
        %v1846 = vadd.f32 %v1844, %v1845
        %vm1847 = vcmask 24576
        %1848 = vst.msk [vmem:[%s528] sm:$0x1] %vm1847, %v1846
        %s1849 = sand.u32 %s384, 1
        %s1850 = scalar_lea.sflag [#allocation9], %s1849
        %s1851 = sand.u32 %s384, 1
        %s1852 = scalar_lea.vmem [#allocation8], %s1851
        // Predicated region
        $region85: #{forward.1} parent=83 // pred_check
          %p1853 = pneg %p394
        $region86: #{forward.1} parent=83 // pred_check_branch
          %1855 = sbr.rel (%p1853) target = $region88
        $region87: #{forward.1} parent=83 // pred_region
          %1857 = vsyncadd %s1850, 0
          %s1858 = scalar_lea.hbm %s16, %s30
          %s1860 = sshll.u32 %s1852, 4
          %s1861 = int_to_ptr.vmem [resolvable:$true] %s1860
          %s1862 = sshll.u32 %s1858, 4
          %s1863 = int_to_ptr.hbm [resolvable:$true] %s1862
          %1865 = dma.vmem_to_hbm [thread:$0]  %s1861, 16, %s1863, %s1850
        $region88: #{forward.1} parent=83 // pred_fallthru
          _
      $region84: #{forward.1} parent=5 // pred_fallthru
        _
      %p1866 = scmp.le.s32.totalorder 2, %s25
      // Predicated region
      $region89: #{forward.1} parent=5 // pred_check
        %p1867 = pneg %p1866
      $region90: #{forward.1} parent=5 // pred_check_branch
        %1869 = sbr.rel (%p1867) target = $region92
      $region91: #{forward.1} parent=5 // pred_region
        %s1870 = ssub.s32 %s25, 2
        // Predicated region
        $region93: #{forward.1} parent=91 // pred_check
          %p1871 = pneg %p400
        $region94: #{forward.1} parent=91 // pred_check_branch
          %1873 = sbr.rel (%p1871) target = $region96
        $region95: #{forward.1} parent=91 // pred_region
          %s1874 = sand.u32 %s385, 1
          %s1875 = scalar_lea.sflag [#allocation9], %s1874
          %s1876 = sand.u32 %s385, 1
          %s1877 = scalar_lea.vmem [#allocation8], %s1876
          %1879 = dma.done %s1875, 16
        $region96: #{forward.1} parent=91 // pred_fallthru
          _
      $region92: #{forward.1} parent=5 // pred_fallthru
        _
    $region6: #{forward.1} parent=1 // loop_footer
      %s29 = sadd.s32 1, %s25
    $region7: #{forward.1} parent=1 // loop_footer_branch
      %24 = sbr.rel target = $region3
    $region8: #{forward.1} parent=1 // loop_exit
      _
    %1880 = vsyncpa [#allocation9], 1
    %s1881 = scalar_lea.sflag [#allocation9], 1
    %1882 = vsyncpa %s1881, 1

</llo_original>
